<compile_context>
chip_gen: v6e
topology: v6e:2x2x1
jax: 0.10.0
libtpu: 0.0.40
codegen_flags: <defaults>
</compile_context>

<pallas_src>
import functools

import jax
import jax.numpy as jnp
import numpy as np
from jax.experimental import pallas as pl
from jax.experimental.pallas import tpu as pltpu


# ---------------------------------------------------------------------------
# Tile-size helper: returns a candidate that divides `dim` exactly, else the
# full dim (keeps every BlockSpec either a multiple of (8,128) or full-extent).
# ---------------------------------------------------------------------------
def _pick_tile(dim, candidates):
    for c in candidates:
        if dim >= c and dim % c == 0:
            return c
    return dim


# ---------------------------------------------------------------------------
# Tiled linear (matmul) kernels: grid (M//tm, N//tn, K//tk), f32 accumulator.
# ---------------------------------------------------------------------------
def _matmul_kernel(x_ref, w_ref, o_ref, acc_ref):
    @pl.when(pl.program_id(2) == 0)
    def _():
        acc_ref[...] = jnp.zeros(acc_ref.shape, acc_ref.dtype)

    acc_ref[...] += jnp.dot(
        x_ref[...], w_ref[...], preferred_element_type=jnp.float32
    )

    @pl.when(pl.program_id(2) == pl.num_programs(2) - 1)
    def _():
        o_ref[...] = acc_ref[...].astype(o_ref.dtype)


def _matmul_bias_kernel(x_ref, w_ref, b_ref, o_ref, acc_ref):
    @pl.when(pl.program_id(2) == 0)
    def _():
        acc_ref[...] = jnp.zeros(acc_ref.shape, acc_ref.dtype)

    acc_ref[...] += jnp.dot(
        x_ref[...], w_ref[...], preferred_element_type=jnp.float32
    )

    @pl.when(pl.program_id(2) == pl.num_programs(2) - 1)
    def _():
        o_ref[...] = (acc_ref[...] + b_ref[...].astype(jnp.float32)).astype(o_ref.dtype)


def pallas_linear(x2d, w, b=None):
    """x2d: (M, K), w: (K, N), b: optional (1, N). Returns (M, N)."""
    M, K = x2d.shape
    Kw, N = w.shape
    assert K == Kw
    tm = _pick_tile(M, (256, 128))
    tn = _pick_tile(N, (256, 128))
    tk = _pick_tile(K, (512, 256, 128))
    grid = (M // tm, N // tn, K // tk)

    x_spec = pl.BlockSpec((tm, tk), lambda i, j, k: (i, k))
    w_spec = pl.BlockSpec((tk, tn), lambda i, j, k: (k, j))
    o_spec = pl.BlockSpec((tm, tn), lambda i, j, k: (i, j))
    out_shape = jax.ShapeDtypeStruct((M, N), x2d.dtype)
    scratch = [pltpu.VMEM((tm, tn), jnp.float32)]
    cparams = pltpu.CompilerParams(
        dimension_semantics=("parallel", "parallel", "arbitrary")
    )

    if b is None:
        return pl.pallas_call(
            _matmul_kernel,
            out_shape=out_shape,
            grid=grid,
            in_specs=[x_spec, w_spec],
            out_specs=o_spec,
            scratch_shapes=scratch,
            compiler_params=cparams,
        )(x2d, w)

    b_spec = pl.BlockSpec((1, tn), lambda i, j, k: (0, j))
    return pl.pallas_call(
        _matmul_bias_kernel,
        out_shape=out_shape,
        grid=grid,
        in_specs=[x_spec, w_spec, b_spec],
        out_specs=o_spec,
        scratch_shapes=scratch,
        compiler_params=cparams,
    )(x2d, w, b)


# ---------------------------------------------------------------------------
# Flash-attention core with additive (rel-pos) bias.
#   qkv_t : (3, B, H, N, D)  -- q already carries the softmax scale
#   bias  : (B, H, N, N)     -- Shaw relative-position bias (already scaled)
# Grid: (B, H, N//tq, N//tk); KV axis last ("arbitrary"), online softmax.
# ---------------------------------------------------------------------------
def _flash_attention_kernel(q_ref, k_ref, v_ref, bias_ref, o_ref,
                            m_sc, l_sc, acc_sc):
    ki = pl.program_id(3)

    @pl.when(ki == 0)
    def _():
        m_sc[...] = jnp.full(m_sc.shape, -jnp.inf, dtype=m_sc.dtype)
        l_sc[...] = jnp.zeros(l_sc.shape, l_sc.dtype)
        acc_sc[...] = jnp.zeros(acc_sc.shape, acc_sc.dtype)

    q = q_ref[0, 0, 0]                              # (tq, D)
    k = k_ref[0, 0, 0]                              # (tk, D)
    v = v_ref[0, 0, 0]                              # (tk, D)
    bias = bias_ref[0, 0].astype(jnp.float32)       # (tq, tk)

    # content-content logits (MXU) + precomputed positional bias
    s = jax.lax.dot_general(
        q, k, (((1,), (1,)), ((), ())), preferred_element_type=jnp.float32
    ) + bias                                        # (tq, tk)

    # online softmax update
    m_prev = m_sc[...]
    m_new = jnp.maximum(m_prev, s.max(axis=-1, keepdims=True))
    alpha = jnp.exp(m_prev - m_new)
    p = jnp.exp(s - m_new)
    l_sc[...] = alpha * l_sc[...] + p.sum(axis=-1, keepdims=True)
    acc_sc[...] = alpha * acc_sc[...] + jnp.dot(
        p.astype(v.dtype), v, preferred_element_type=jnp.float32
    )
    m_sc[...] = m_new

    @pl.when(ki == pl.num_programs(3) - 1)
    def _():
        inv_l = pl.reciprocal(l_sc[...], approx=True)
        o_ref[0, 0] = (acc_sc[...] * inv_l).astype(o_ref.dtype)


def pallas_flash_attention(qkv_t, bias):
    """qkv_t: (3, B, H, N, D); bias: (B, H, N, N). Returns (B, H, N, D)."""
    three, B, H, N, D = qkv_t.shape
    assert three == 3
    tq = _pick_tile(N, (256, 128))
    tk = _pick_tile(N, (256, 128))
    grid = (B, H, N // tq, N // tk)

    q_spec = pl.BlockSpec((1, 1, 1, tq, D), lambda b, h, qi, ki: (0, b, h, qi, 0))
    k_spec = pl.BlockSpec((1, 1, 1, tk, D), lambda b, h, qi, ki: (1, b, h, ki, 0))
    v_spec = pl.BlockSpec((1, 1, 1, tk, D), lambda b, h, qi, ki: (2, b, h, ki, 0))
    b_spec = pl.BlockSpec((1, 1, tq, tk), lambda b, h, qi, ki: (b, h, qi, ki))
    o_spec = pl.BlockSpec((1, 1, tq, D), lambda b, h, qi, ki: (b, h, qi, 0))

    return pl.pallas_call(
        _flash_attention_kernel,
        out_shape=jax.ShapeDtypeStruct((B, H, N, D), qkv_t.dtype),
        grid=grid,
        in_specs=[q_spec, k_spec, v_spec, b_spec],
        out_specs=o_spec,
        scratch_shapes=[
            pltpu.VMEM((tq, 1), jnp.float32),   # running max  m
            pltpu.VMEM((tq, 1), jnp.float32),   # running sum  l
            pltpu.VMEM((tq, D), jnp.float32),   # accumulator
        ],
        compiler_params=pltpu.CompilerParams(
            dimension_semantics=("parallel", "parallel", "parallel", "arbitrary")
        ),
    )(qkv_t, qkv_t, qkv_t, bias)


# ---------------------------------------------------------------------------
# Full module forward (self-attention, no mask, dropout=0.0 -> identity)
# ---------------------------------------------------------------------------
def attention_forward(x, params, *, heads, dim_head, max_pos_emb):
    b, n, dim = x.shape
    inner = heads * dim_head
    scale = dim_head ** (-0.5)

    # Fold the softmax scale into the q weight (applies to both content and
    # positional terms), and fuse q|k|v into one projection.
    wqkv = jnp.concatenate([params["wq"] * scale, params["wkv"]], axis=-1)  # (dim, 3*inner)

    x2d = x.reshape(b * n, dim)
    qkv = pallas_linear(x2d, wqkv)                                  # (b*n, 3*inner)

    # --- Shaw rel-pos bias: pos_all = q_scaled @ emb.T  (MXU matmul), then
    #     gather columns with the (n, n) dist map (cheap JAX table lookup). ---
    num_rel = 2 * max_pos_emb + 1
    rel_pad = ((num_rel + 127) // 128) * 128
    embT = jnp.zeros((dim_head, rel_pad), dtype=x.dtype)
    embT = embT.at[:, :num_rel].set(params["emb"].T.astype(x.dtype))
    q_flat = qkv[:, :inner].reshape(b * n * heads, dim_head)        # (b*n*h, d)
    pos_all = pallas_linear(q_flat, embT).reshape(b, n, heads, rel_pad)

    seq = jnp.arange(n)
    dist = (jnp.clip(seq[:, None] - seq[None, :], -max_pos_emb, max_pos_emb)
            + max_pos_emb).astype(jnp.int32)                        # (n, n)
    idx = jnp.broadcast_to(dist[None, :, None, :], (b, n, heads, n))
    pos_bias = jnp.take_along_axis(pos_all, idx, axis=-1)           # (b, n, h, n)
    pos_bias = pos_bias.transpose(0, 2, 1, 3)                       # (b, h, n, n)

    # --- q/k/v as one (3, b, h, n, d) array; kernel slices via index maps. ---
    qkv_t = qkv.reshape(b, n, 3, heads, dim_head).transpose(2, 0, 3, 1, 4)

    out = pallas_flash_attention(qkv_t, pos_bias)                   # (b, h, n, d)
    out = out.transpose(0, 2, 1, 3).reshape(b * n, inner)           # b n (h d)
    out = pallas_linear(out, params["wo"], params["bo"])            # (b*n, dim)
    # TODO(synk): dropout is a no-op here (dropout=0.0 / eval mode); the
    # optional mask / cross-attention context paths of the module are unused.
    return out.reshape(b, n, dim)


# ---------------------------------------------------------------------------
# Pure-JAX reference (mirrors the PyTorch forward) for a sanity check
# ---------------------------------------------------------------------------
def attention_reference(x, params, *, heads, dim_head, max_pos_emb):
    b, n, dim = x.shape
    scale = dim_head ** (-0.5)
    q = x @ params["wq"]
    kv = x @ params["wkv"]
    k, v = jnp.split(kv, 2, axis=-1)

    def to_bhnd(t):
        return t.reshape(b, n, heads, dim_head).transpose(0, 2, 1, 3)

    q, k, v = map(to_bhnd, (q, k, v))
    dots = jnp.einsum("bhid,bhjd->bhij", q, k) * scale
    seq = jnp.arange(n)
    dist = jnp.clip(seq[:, None] - seq[None, :], -max_pos_emb, max_pos_emb) + max_pos_emb
    rel = params["emb"][dist]
    pos = jnp.einsum("bhnd,nrd->bhnr", q, rel) * scale
    attn = jax.nn.softmax(dots + pos, axis=-1)
    out = jnp.einsum("bhij,bhjd->bhid", attn, v)
    out = out.transpose(0, 2, 1, 3).reshape(b, n, heads * dim_head)
    return out @ params["wo"] + params["bo"]


# ---------------------------------------------------------------------------
if __name__ == "__main__":
    # Small shapes consistent with the module
    batch, seq_len, dim = 2, 8, 32
    heads, dim_head = 4, 16
    max_pos_emb = 512
    inner = heads * dim_head

    key = jax.random.PRNGKey(0)
    kx, kq, kkv, kwo, kbo, kemb = jax.random.split(key, 6)

    x = jax.random.normal(kx, (batch, seq_len, dim), dtype=jnp.float32)
    params = {
        "wq": 0.02 * jax.random.normal(kq, (dim, inner), dtype=jnp.float32),
        "wkv": 0.02 * jax.random.normal(kkv, (dim, 2 * inner), dtype=jnp.float32),
        "wo": 0.02 * jax.random.normal(kwo, (inner, dim), dtype=jnp.float32),
        "bo": 0.02 * jax.random.normal(kbo, (1, dim), dtype=jnp.float32),
        "emb": 0.02 * jax.random.normal(
            kemb, (2 * max_pos_emb + 1, dim_head), dtype=jnp.float32
        ),
    }

    fwd = jax.jit(
        functools.partial(
            attention_forward, heads=heads, dim_head=dim_head, max_pos_emb=max_pos_emb
        )
    )
    out = fwd(x, params)
    out = jax.block_until_ready(out)

    ref = attention_reference(
        x, params, heads=heads, dim_head=dim_head, max_pos_emb=max_pos_emb
    )
    np.testing.assert_allclose(np.asarray(out), np.asarray(ref), rtol=2e-3, atol=2e-3)

    print("KERNEL_OK")
</pallas_src>

<mosaic_0001>
module attributes {stable_mosaic.version = 11 : i64} {
  func.func @_matmul_kernel(%arg0: i32, %arg1: i32, %arg2: i32, %arg3: memref<16x32xf32, #tpu.memory_space<vmem>>, %arg4: memref<32x192xf32, #tpu.memory_space<vmem>>, %arg5: memref<16x192xf32, #tpu.memory_space<vmem>>, %arg6: memref<16x192xf32, #tpu.memory_space<vmem>>) attributes {dimension_semantics = [#tpu.dimension_semantics<parallel>, #tpu.dimension_semantics<parallel>, #tpu.dimension_semantics<arbitrary>], iteration_bounds = array<i64: 1, 1, 1>, scalar_prefetch = 0 : i64, scratch_operands = 1 : i64, tpu.core_type = #tpu.core_type<tc>, window_params = [{transform_indices = @transform_0, window_bounds = array<i64: 16, 32>}, {transform_indices = @transform_1, window_bounds = array<i64: 32, 192>}, {transform_indices = @transform_2, window_bounds = array<i64: 16, 192>}]} {
    %c0_i32 = arith.constant 0 : i32
    %0 = arith.cmpi eq, %arg2, %c0_i32 : i32
    %1 = arith.extui %0 : i1 to i32
    %c0_i32_0 = arith.constant 0 : i32
    %2 = arith.cmpi ne, %1, %c0_i32_0 : i32
    scf.if %2 {
      %cst_10 = arith.constant 0.000000e+00 : f32
      %12 = vector.broadcast %cst_10 : f32 to vector<16x192xf32>
      %c0_11 = arith.constant 0 : index
      %c0_12 = arith.constant 0 : index
      %13 = vector.load %arg6[%c0_11, %c0_12] : memref<16x192xf32, #tpu.memory_space<vmem>>, vector<16x192xf32>
      tpu.vector_store %arg6[%c0_11, %c0_12], %12 {strides = array<i32>} : memref<16x192xf32, #tpu.memory_space<vmem>>, vector<16x192xf32>,
    } else {
    }
    %c0 = arith.constant 0 : index
    %c0_1 = arith.constant 0 : index
    %3 = vector.load %arg6[%c0, %c0_1] : memref<16x192xf32, #tpu.memory_space<vmem>>, vector<16x192xf32>
    %c0_2 = arith.constant 0 : index
    %c0_3 = arith.constant 0 : index
    %4 = vector.load %arg3[%c0_2, %c0_3] : memref<16x32xf32, #tpu.memory_space<vmem>>, vector<16x32xf32>
    %c0_4 = arith.constant 0 : index
    %c0_5 = arith.constant 0 : index
    %5 = vector.load %arg4[%c0_4, %c0_5] : memref<32x192xf32, #tpu.memory_space<vmem>>, vector<32x192xf32>
    %cst = arith.constant dense<0.000000e+00> : vector<16x192xf32>
    %6 = tpu.matmul %4, %5, %cst {dimension_numbers = #tpu.dot_dimension_numbers<[1], [0], [0], [1], [0, 0, 1, 1], [], []>} : vector<16x32xf32>, vector<32x192xf32>, vector<16x192xf32> -> vector<16x192xf32>
    %7 = arith.addf %3, %6 : vector<16x192xf32>
    %c0_6 = arith.constant 0 : index
    %c0_7 = arith.constant 0 : index
    %8 = vector.load %arg6[%c0_6, %c0_7] : memref<16x192xf32, #tpu.memory_space<vmem>>, vector<16x192xf32>
    tpu.vector_store %arg6[%c0_6, %c0_7], %7 {strides = array<i32>} : memref<16x192xf32, #tpu.memory_space<vmem>>, vector<16x192xf32>,
    %c0_i32_8 = arith.constant 0 : i32
    %9 = arith.cmpi eq, %arg2, %c0_i32_8 : i32
    %10 = arith.extui %9 : i1 to i32
    %c0_i32_9 = arith.constant 0 : i32
    %11 = arith.cmpi ne, %10, %c0_i32_9 : i32
    scf.if %11 {
      %c0_10 = arith.constant 0 : index
      %c0_11 = arith.constant 0 : index
      %12 = vector.load %arg6[%c0_10, %c0_11] : memref<16x192xf32, #tpu.memory_space<vmem>>, vector<16x192xf32>
      %c0_12 = arith.constant 0 : index
      %c0_13 = arith.constant 0 : index
      %13 = vector.load %arg5[%c0_12, %c0_13] : memref<16x192xf32, #tpu.memory_space<vmem>>, vector<16x192xf32>
      tpu.vector_store %arg5[%c0_12, %c0_13], %12 {strides = array<i32>} : memref<16x192xf32, #tpu.memory_space<vmem>>, vector<16x192xf32>,
    } else {
    }
    return
  }
  func.func @transform_0(%arg0: i32, %arg1: i32, %arg2: i32) -> (i32, i32) {
    %c0_i32 = arith.constant 0 : i32
    return %arg0, %arg2 : i32, i32
  }
  func.func @transform_1(%arg0: i32, %arg1: i32, %arg2: i32) -> (i32, i32) {
    %c0_i32 = arith.constant 0 : i32
    return %arg2, %arg1 : i32, i32
  }
  func.func @transform_2(%arg0: i32, %arg1: i32, %arg2: i32) -> (i32, i32) {
    %c0_i32 = arith.constant 0 : i32
    return %arg0, %arg1 : i32, i32
  }
}

module attributes {stable_mosaic.version = 11 : i64} {
  func.func @_matmul_kernel(%arg0: i32, %arg1: i32, %arg2: i32, %arg3: memref<64x16xf32, #tpu.memory_space<vmem>>, %arg4: memref<16x128xf32, #tpu.memory_space<vmem>>, %arg5: memref<64x128xf32, #tpu.memory_space<vmem>>, %arg6: memref<64x128xf32, #tpu.memory_space<vmem>>) attributes {dimension_semantics = [#tpu.dimension_semantics<parallel>, #tpu.dimension_semantics<parallel>, #tpu.dimension_semantics<arbitrary>], iteration_bounds = array<i64: 1, 9, 1>, scalar_prefetch = 0 : i64, scratch_operands = 1 : i64, tpu.core_type = #tpu.core_type<tc>, window_params = [{transform_indices = @transform_0, window_bounds = array<i64: 64, 16>}, {transform_indices = @transform_1, window_bounds = array<i64: 16, 128>}, {transform_indices = @transform_2, window_bounds = array<i64: 64, 128>}]} {
    %c0_i32 = arith.constant 0 : i32
    %0 = arith.cmpi eq, %arg2, %c0_i32 : i32
    %1 = arith.extui %0 : i1 to i32
    %c0_i32_0 = arith.constant 0 : i32
    %2 = arith.cmpi ne, %1, %c0_i32_0 : i32
    scf.if %2 {
      %cst_10 = arith.constant 0.000000e+00 : f32
      %12 = vector.broadcast %cst_10 : f32 to vector<64x128xf32>
      %c0_11 = arith.constant 0 : index
      %c0_12 = arith.constant 0 : index
      %13 = vector.load %arg6[%c0_11, %c0_12] : memref<64x128xf32, #tpu.memory_space<vmem>>, vector<64x128xf32>
      tpu.vector_store %arg6[%c0_11, %c0_12], %12 {strides = array<i32>} : memref<64x128xf32, #tpu.memory_space<vmem>>, vector<64x128xf32>,
    } else {
    }
    %c0 = arith.constant 0 : index
    %c0_1 = arith.constant 0 : index
    %3 = vector.load %arg6[%c0, %c0_1] : memref<64x128xf32, #tpu.memory_space<vmem>>, vector<64x128xf32>
    %c0_2 = arith.constant 0 : index
    %c0_3 = arith.constant 0 : index
    %4 = vector.load %arg3[%c0_2, %c0_3] : memref<64x16xf32, #tpu.memory_space<vmem>>, vector<64x16xf32>
    %c0_4 = arith.constant 0 : index
    %c0_5 = arith.constant 0 : index
    %5 = vector.load %arg4[%c0_4, %c0_5] : memref<16x128xf32, #tpu.memory_space<vmem>>, vector<16x128xf32>
    %cst = arith.constant dense<0.000000e+00> : vector<64x128xf32>
    %6 = tpu.matmul %4, %5, %cst {dimension_numbers = #tpu.dot_dimension_numbers<[1], [0], [0], [1], [0, 0, 1, 1], [], []>} : vector<64x16xf32>, vector<16x128xf32>, vector<64x128xf32> -> vector<64x128xf32>
    %7 = arith.addf %3, %6 : vector<64x128xf32>
    %c0_6 = arith.constant 0 : index
    %c0_7 = arith.constant 0 : index
    %8 = vector.load %arg6[%c0_6, %c0_7] : memref<64x128xf32, #tpu.memory_space<vmem>>, vector<64x128xf32>
    tpu.vector_store %arg6[%c0_6, %c0_7], %7 {strides = array<i32>} : memref<64x128xf32, #tpu.memory_space<vmem>>, vector<64x128xf32>,
    %c0_i32_8 = arith.constant 0 : i32
    %9 = arith.cmpi eq, %arg2, %c0_i32_8 : i32
    %10 = arith.extui %9 : i1 to i32
    %c0_i32_9 = arith.constant 0 : i32
    %11 = arith.cmpi ne, %10, %c0_i32_9 : i32
    scf.if %11 {
      %c0_10 = arith.constant 0 : index
      %c0_11 = arith.constant 0 : index
      %12 = vector.load %arg6[%c0_10, %c0_11] : memref<64x128xf32, #tpu.memory_space<vmem>>, vector<64x128xf32>
      %c0_12 = arith.constant 0 : index
      %c0_13 = arith.constant 0 : index
      %13 = vector.load %arg5[%c0_12, %c0_13] : memref<64x128xf32, #tpu.memory_space<vmem>>, vector<64x128xf32>
      tpu.vector_store %arg5[%c0_12, %c0_13], %12 {strides = array<i32>} : memref<64x128xf32, #tpu.memory_space<vmem>>, vector<64x128xf32>,
    } else {
    }
    return
  }
  func.func @transform_0(%arg0: i32, %arg1: i32, %arg2: i32) -> (i32, i32) {
    %c0_i32 = arith.constant 0 : i32
    return %arg0, %arg2 : i32, i32
  }
  func.func @transform_1(%arg0: i32, %arg1: i32, %arg2: i32) -> (i32, i32) {
    %c0_i32 = arith.constant 0 : i32
    return %arg2, %arg1 : i32, i32
  }
  func.func @transform_2(%arg0: i32, %arg1: i32, %arg2: i32) -> (i32, i32) {
    %c0_i32 = arith.constant 0 : i32
    return %arg0, %arg1 : i32, i32
  }
}

module attributes {stable_mosaic.version = 11 : i64} {
  func.func @_flash_attention_kernel(%arg0: i32, %arg1: i32, %arg2: i32, %arg3: i32, %arg4: memref<1x1x1x8x16xf32, #tpu.memory_space<vmem>>, %arg5: memref<1x1x1x8x16xf32, #tpu.memory_space<vmem>>, %arg6: memref<1x1x1x8x16xf32, #tpu.memory_space<vmem>>, %arg7: memref<1x1x8x8xf32, #tpu.memory_space<vmem>>, %arg8: memref<1x1x8x16xf32, #tpu.memory_space<vmem>>, %arg9: memref<8x1xf32, #tpu.memory_space<vmem>>, %arg10: memref<8x1xf32, #tpu.memory_space<vmem>>, %arg11: memref<8x16xf32, #tpu.memory_space<vmem>>) attributes {dimension_semantics = [#tpu.dimension_semantics<parallel>, #tpu.dimension_semantics<parallel>, #tpu.dimension_semantics<parallel>, #tpu.dimension_semantics<arbitrary>], iteration_bounds = array<i64: 2, 4, 1, 1>, scalar_prefetch = 0 : i64, scratch_operands = 3 : i64, tpu.core_type = #tpu.core_type<tc>, window_params = [{transform_indices = @transform_0, window_bounds = array<i64: 1, 1, 1, 8, 16>}, {transform_indices = @transform_1, window_bounds = array<i64: 1, 1, 1, 8, 16>}, {transform_indices = @transform_2, window_bounds = array<i64: 1, 1, 1, 8, 16>}, {transform_indices = @transform_3, window_bounds = array<i64: 1, 1, 8, 8>}, {transform_indices = @transform_4, window_bounds = array<i64: 1, 1, 8, 16>}]} {
    %c0_i32 = arith.constant 0 : i32
    %0 = arith.cmpi eq, %arg3, %c0_i32 : i32
    %1 = arith.extui %0 : i1 to i32
    %c0_i32_0 = arith.constant 0 : i32
    %2 = arith.cmpi ne, %1, %c0_i32_0 : i32
    scf.if %2 {
      %cst_36 = arith.constant 0xFF800000 : f32
      %38 = vector.broadcast %cst_36 : f32 to vector<8x1xf32>
      %c0_37 = arith.constant 0 : index
      %c0_38 = arith.constant 0 : index
      %39 = vector.load %arg9[%c0_37, %c0_38] : memref<8x1xf32, #tpu.memory_space<vmem>>, vector<8x1xf32>
      tpu.vector_store %arg9[%c0_37, %c0_38], %38 {strides = array<i32>} : memref<8x1xf32, #tpu.memory_space<vmem>>, vector<8x1xf32>,
      %cst_39 = arith.constant 0.000000e+00 : f32
      %40 = vector.broadcast %cst_39 : f32 to vector<8x1xf32>
      %c0_40 = arith.constant 0 : index
      %c0_41 = arith.constant 0 : index
      %41 = vector.load %arg10[%c0_40, %c0_41] : memref<8x1xf32, #tpu.memory_space<vmem>>, vector<8x1xf32>
      tpu.vector_store %arg10[%c0_40, %c0_41], %40 {strides = array<i32>} : memref<8x1xf32, #tpu.memory_space<vmem>>, vector<8x1xf32>,
      %cst_42 = arith.constant 0.000000e+00 : f32
      %42 = vector.broadcast %cst_42 : f32 to vector<8x16xf32>
      %c0_43 = arith.constant 0 : index
      %c0_44 = arith.constant 0 : index
      %43 = vector.load %arg11[%c0_43, %c0_44] : memref<8x16xf32, #tpu.memory_space<vmem>>, vector<8x16xf32>
      tpu.vector_store %arg11[%c0_43, %c0_44], %42 {strides = array<i32>} : memref<8x16xf32, #tpu.memory_space<vmem>>, vector<8x16xf32>,
    } else {
    }
    %c0 = arith.constant 0 : index
    %c0_1 = arith.constant 0 : index
    %c0_2 = arith.constant 0 : index
    %c0_3 = arith.constant 0 : index
    %c0_4 = arith.constant 0 : index
    %3 = vector.load %arg4[%c0, %c0_1, %c0_2, %c0_3, %c0_4] : memref<1x1x1x8x16xf32, #tpu.memory_space<vmem>>, vector<1x1x1x8x16xf32>
    %4 = vector.shape_cast %3 : vector<1x1x1x8x16xf32> to vector<8x16xf32>
    %c0_5 = arith.constant 0 : index
    %c0_6 = arith.constant 0 : index
    %c0_7 = arith.constant 0 : index
    %c0_8 = arith.constant 0 : index
    %c0_9 = arith.constant 0 : index
    %5 = vector.load %arg5[%c0_5, %c0_6, %c0_7, %c0_8, %c0_9] : memref<1x1x1x8x16xf32, #tpu.memory_space<vmem>>, vector<1x1x1x8x16xf32>
    %6 = vector.shape_cast %5 : vector<1x1x1x8x16xf32> to vector<8x16xf32>
    %c0_10 = arith.constant 0 : index
    %c0_11 = arith.constant 0 : index
    %c0_12 = arith.constant 0 : index
    %c0_13 = arith.constant 0 : index
    %c0_14 = arith.constant 0 : index
    %7 = vector.load %arg6[%c0_10, %c0_11, %c0_12, %c0_13, %c0_14] : memref<1x1x1x8x16xf32, #tpu.memory_space<vmem>>, vector<1x1x1x8x16xf32>
    %8 = vector.shape_cast %7 : vector<1x1x1x8x16xf32> to vector<8x16xf32>
    %c0_15 = arith.constant 0 : index
    %c0_16 = arith.constant 0 : index
    %c0_17 = arith.constant 0 : index
    %c0_18 = arith.constant 0 : index
    %9 = vector.load %arg7[%c0_15, %c0_16, %c0_17, %c0_18] : memref<1x1x8x8xf32, #tpu.memory_space<vmem>>, vector<1x1x8x8xf32>
    %10 = vector.shape_cast %9 : vector<1x1x8x8xf32> to vector<8x8xf32>
    %cst = arith.constant dense<0.000000e+00> : vector<8x8xf32>
    %11 = tpu.matmul %4, %6, %cst {dimension_numbers = #tpu.dot_dimension_numbers<[1], [1], [0], [0], [0, 0, 1, 0], [], []>} : vector<8x16xf32>, vector<8x16xf32>, vector<8x8xf32> -> vector<8x8xf32>
    %12 = arith.addf %11, %10 : vector<8x8xf32>
    %c0_19 = arith.constant 0 : index
    %c0_20 = arith.constant 0 : index
    %13 = vector.load %arg9[%c0_19, %c0_20] : memref<8x1xf32, #tpu.memory_space<vmem>>, vector<8x1xf32>
    %cst_21 = arith.constant dense<0xFF800000> : vector<8xf32>
    %14 = vector.multi_reduction <maximumf>, %12, %cst_21 [1] : vector<8x8xf32> to vector<8xf32>
    %15 = vector.shape_cast %14 : vector<8xf32> to vector<8x1xf32>
    %16 = arith.maximumf %13, %15 : vector<8x1xf32>
    %17 = arith.subf %13, %16 : vector<8x1xf32>
    %18 = math.exp %17 : vector<8x1xf32>
    %19 = vector.broadcast %16 : vector<8x1xf32> to vector<8x8xf32>
    %20 = arith.subf %12, %19 : vector<8x8xf32>
    %21 = math.exp %20 : vector<8x8xf32>
    %c0_22 = arith.constant 0 : index
    %c0_23 = arith.constant 0 : index
    %22 = vector.load %arg10[%c0_22, %c0_23] : memref<8x1xf32, #tpu.memory_space<vmem>>, vector<8x1xf32>
    %23 = arith.mulf %18, %22 : vector<8x1xf32>
    %cst_24 = arith.constant dense<0.000000e+00> : vector<8xf32>
    %24 = vector.multi_reduction <add>, %21, %cst_24 [1] : vector<8x8xf32> to vector<8xf32>
    %25 = vector.shape_cast %24 : vector<8xf32> to vector<8x1xf32>
    %26 = arith.addf %23, %25 : vector<8x1xf32>
    %c0_25 = arith.constant 0 : index
    %c0_26 = arith.constant 0 : index
    %27 = vector.load %arg10[%c0_25, %c0_26] : memref<8x1xf32, #tpu.memory_space<vmem>>, vector<8x1xf32>
    tpu.vector_store %arg10[%c0_25, %c0_26], %26 {strides = array<i32>} : memref<8x1xf32, #tpu.memory_space<vmem>>, vector<8x1xf32>,
    %c0_27 = arith.constant 0 : index
    %c0_28 = arith.constant 0 : index
    %28 = vector.load %arg11[%c0_27, %c0_28] : memref<8x16xf32, #tpu.memory_space<vmem>>, vector<8x16xf32>
    %29 = vector.broadcast %18 : vector<8x1xf32> to vector<8x16xf32>
    %30 = arith.mulf %29, %28 : vector<8x16xf32>
    %cst_29 = arith.constant dense<0.000000e+00> : vector<8x16xf32>
    %31 = tpu.matmul %21, %8, %cst_29 {dimension_numbers = #tpu.dot_dimension_numbers<[1], [0], [0], [1], [0, 0, 1, 1], [], []>} : vector<8x8xf32>, vector<8x16xf32>, vector<8x16xf32> -> vector<8x16xf32>
    %32 = arith.addf %30, %31 : vector<8x16xf32>
    %c0_30 = arith.constant 0 : index
    %c0_31 = arith.constant 0 : index
    %33 = vector.load %arg11[%c0_30, %c0_31] : memref<8x16xf32, #tpu.memory_space<vmem>>, vector<8x16xf32>
    tpu.vector_store %arg11[%c0_30, %c0_31], %32 {strides = array<i32>} : memref<8x16xf32, #tpu.memory_space<vmem>>, vector<8x16xf32>,
    %c0_32 = arith.constant 0 : index
    %c0_33 = arith.constant 0 : index
    %34 = vector.load %arg9[%c0_32, %c0_33] : memref<8x1xf32, #tpu.memory_space<vmem>>, vector<8x1xf32>
    tpu.vector_store %arg9[%c0_32, %c0_33], %16 {strides = array<i32>} : memref<8x1xf32, #tpu.memory_space<vmem>>, vector<8x1xf32>,
    %c0_i32_34 = arith.constant 0 : i32
    %35 = arith.cmpi eq, %arg3, %c0_i32_34 : i32
    %36 = arith.extui %35 : i1 to i32
    %c0_i32_35 = arith.constant 0 : i32
    %37 = arith.cmpi ne, %36, %c0_i32_35 : i32
    scf.if %37 {
      %c0_36 = arith.constant 0 : index
      %c0_37 = arith.constant 0 : index
      %38 = vector.load %arg10[%c0_36, %c0_37] : memref<8x1xf32, #tpu.memory_space<vmem>>, vector<8x1xf32>
      %39 = tpu.reciprocal %38 {approx = true} : vector<8x1xf32> -> vector<8x1xf32>
      %c0_38 = arith.constant 0 : index
      %c0_39 = arith.constant 0 : index
      %40 = vector.load %arg11[%c0_38, %c0_39] : memref<8x16xf32, #tpu.memory_space<vmem>>, vector<8x16xf32>
      %41 = vector.broadcast %39 : vector<8x1xf32> to vector<8x16xf32>
      %42 = arith.mulf %40, %41 : vector<8x16xf32>
      %c0_40 = arith.constant 0 : index
      %c0_41 = arith.constant 0 : index
      %c0_42 = arith.constant 0 : index
      %c0_43 = arith.constant 0 : index
      %43 = vector.load %arg8[%c0_40, %c0_41, %c0_42, %c0_43] : memref<1x1x8x16xf32, #tpu.memory_space<vmem>>, vector<1x1x8x16xf32>
      %44 = vector.shape_cast %43 : vector<1x1x8x16xf32> to vector<8x16xf32>
      %45 = vector.shape_cast %42 : vector<8x16xf32> to vector<1x1x8x16xf32>
      tpu.vector_store %arg8[%c0_40, %c0_41, %c0_42, %c0_43], %45 {strides = array<i32>} : memref<1x1x8x16xf32, #tpu.memory_space<vmem>>, vector<1x1x8x16xf32>,
    } else {
    }
    return
  }
  func.func @transform_0(%arg0: i32, %arg1: i32, %arg2: i32, %arg3: i32) -> (i32, i32, i32, i32, i32) {
    %c0_i32 = arith.constant 0 : i32
    %c0_i32_0 = arith.constant 0 : i32
    %c0_i32_1 = arith.constant 0 : i32
    return %c0_i32, %arg0, %arg1, %arg2, %c0_i32_0 : i32, i32, i32, i32, i32
  }
  func.func @transform_1(%arg0: i32, %arg1: i32, %arg2: i32, %arg3: i32) -> (i32, i32, i32, i32, i32) {
    %c1_i32 = arith.constant 1 : i32
    %c0_i32 = arith.constant 0 : i32
    %c0_i32_0 = arith.constant 0 : i32
    return %c1_i32, %arg0, %arg1, %arg3, %c0_i32 : i32, i32, i32, i32, i32
  }
  func.func @transform_2(%arg0: i32, %arg1: i32, %arg2: i32, %arg3: i32) -> (i32, i32, i32, i32, i32) {
    %c2_i32 = arith.constant 2 : i32
    %c0_i32 = arith.constant 0 : i32
    %c0_i32_0 = arith.constant 0 : i32
    return %c2_i32, %arg0, %arg1, %arg3, %c0_i32 : i32, i32, i32, i32, i32
  }
  func.func @transform_3(%arg0: i32, %arg1: i32, %arg2: i32, %arg3: i32) -> (i32, i32, i32, i32) {
    %c0_i32 = arith.constant 0 : i32
    return %arg0, %arg1, %arg2, %arg3 : i32, i32, i32, i32
  }
  func.func @transform_4(%arg0: i32, %arg1: i32, %arg2: i32, %arg3: i32) -> (i32, i32, i32, i32) {
    %c0_i32 = arith.constant 0 : i32
    %c0_i32_0 = arith.constant 0 : i32
    return %arg0, %arg1, %arg2, %c0_i32 : i32, i32, i32, i32
  }
}

module attributes {stable_mosaic.version = 11 : i64} {
  func.func @_matmul_bias_kernel(%arg0: i32, %arg1: i32, %arg2: i32, %arg3: memref<16x64xf32, #tpu.memory_space<vmem>>, %arg4: memref<64x32xf32, #tpu.memory_space<vmem>>, %arg5: memref<1x32xf32, #tpu.memory_space<vmem>>, %arg6: memref<16x32xf32, #tpu.memory_space<vmem>>, %arg7: memref<16x32xf32, #tpu.memory_space<vmem>>) attributes {dimension_semantics = [#tpu.dimension_semantics<parallel>, #tpu.dimension_semantics<parallel>, #tpu.dimension_semantics<arbitrary>], iteration_bounds = array<i64: 1, 1, 1>, scalar_prefetch = 0 : i64, scratch_operands = 1 : i64, tpu.core_type = #tpu.core_type<tc>, window_params = [{transform_indices = @transform_0, window_bounds = array<i64: 16, 64>}, {transform_indices = @transform_1, window_bounds = array<i64: 64, 32>}, {transform_indices = @transform_2, window_bounds = array<i64: 1, 32>}, {transform_indices = @transform_3, window_bounds = array<i64: 16, 32>}]} {
    %c0_i32 = arith.constant 0 : i32
    %0 = arith.cmpi eq, %arg2, %c0_i32 : i32
    %1 = arith.extui %0 : i1 to i32
    %c0_i32_0 = arith.constant 0 : i32
    %2 = arith.cmpi ne, %1, %c0_i32_0 : i32
    scf.if %2 {
      %cst_10 = arith.constant 0.000000e+00 : f32
      %12 = vector.broadcast %cst_10 : f32 to vector<16x32xf32>
      %c0_11 = arith.constant 0 : index
      %c0_12 = arith.constant 0 : index
      %13 = vector.load %arg7[%c0_11, %c0_12] : memref<16x32xf32, #tpu.memory_space<vmem>>, vector<16x32xf32>
      tpu.vector_store %arg7[%c0_11, %c0_12], %12 {strides = array<i32>} : memref<16x32xf32, #tpu.memory_space<vmem>>, vector<16x32xf32>,
    } else {
    }
    %c0 = arith.constant 0 : index
    %c0_1 = arith.constant 0 : index
    %3 = vector.load %arg7[%c0, %c0_1] : memref<16x32xf32, #tpu.memory_space<vmem>>, vector<16x32xf32>
    %c0_2 = arith.constant 0 : index
    %c0_3 = arith.constant 0 : index
    %4 = vector.load %arg3[%c0_2, %c0_3] : memref<16x64xf32, #tpu.memory_space<vmem>>, vector<16x64xf32>
    %c0_4 = arith.constant 0 : index
    %c0_5 = arith.constant 0 : index
    %5 = vector.load %arg4[%c0_4, %c0_5] : memref<64x32xf32, #tpu.memory_space<vmem>>, vector<64x32xf32>
    %cst = arith.constant dense<0.000000e+00> : vector<16x32xf32>
    %6 = tpu.matmul %4, %5, %cst {dimension_numbers = #tpu.dot_dimension_numbers<[1], [0], [0], [1], [0, 0, 1, 1], [], []>} : vector<16x64xf32>, vector<64x32xf32>, vector<16x32xf32> -> vector<16x32xf32>
    %7 = arith.addf %3, %6 : vector<16x32xf32>
    %c0_6 = arith.constant 0 : index
    %c0_7 = arith.constant 0 : index
    %8 = vector.load %arg7[%c0_6, %c0_7] : memref<16x32xf32, #tpu.memory_space<vmem>>, vector<16x32xf32>
    tpu.vector_store %arg7[%c0_6, %c0_7], %7 {strides = array<i32>} : memref<16x32xf32, #tpu.memory_space<vmem>>, vector<16x32xf32>,
    %c0_i32_8 = arith.constant 0 : i32
    %9 = arith.cmpi eq, %arg2, %c0_i32_8 : i32
    %10 = arith.extui %9 : i1 to i32
    %c0_i32_9 = arith.constant 0 : i32
    %11 = arith.cmpi ne, %10, %c0_i32_9 : i32
    scf.if %11 {
      %c0_10 = arith.constant 0 : index
      %c0_11 = arith.constant 0 : index
      %12 = vector.load %arg7[%c0_10, %c0_11] : memref<16x32xf32, #tpu.memory_space<vmem>>, vector<16x32xf32>
      %c0_12 = arith.constant 0 : index
      %c0_13 = arith.constant 0 : index
      %13 = vector.load %arg5[%c0_12, %c0_13] : memref<1x32xf32, #tpu.memory_space<vmem>>, vector<1x32xf32>
      %14 = vector.broadcast %13 : vector<1x32xf32> to vector<16x32xf32>
      %15 = arith.addf %12, %14 : vector<16x32xf32>
      %c0_14 = arith.constant 0 : index
      %c0_15 = arith.constant 0 : index
      %16 = vector.load %arg6[%c0_14, %c0_15] : memref<16x32xf32, #tpu.memory_space<vmem>>, vector<16x32xf32>
      tpu.vector_store %arg6[%c0_14, %c0_15], %15 {strides = array<i32>} : memref<16x32xf32, #tpu.memory_space<vmem>>, vector<16x32xf32>,
    } else {
    }
    return
  }
  func.func @transform_0(%arg0: i32, %arg1: i32, %arg2: i32) -> (i32, i32) {
    %c0_i32 = arith.constant 0 : i32
    return %arg0, %arg2 : i32, i32
  }
  func.func @transform_1(%arg0: i32, %arg1: i32, %arg2: i32) -> (i32, i32) {
    %c0_i32 = arith.constant 0 : i32
    return %arg2, %arg1 : i32, i32
  }
  func.func @transform_2(%arg0: i32, %arg1: i32, %arg2: i32) -> (i32, i32) {
    %c0_i32 = arith.constant 0 : i32
    %c0_i32_0 = arith.constant 0 : i32
    return %c0_i32, %arg1 : i32, i32
  }
  func.func @transform_3(%arg0: i32, %arg1: i32, %arg2: i32) -> (i32, i32) {
    %c0_i32 = arith.constant 0 : i32
    return %arg0, %arg1 : i32, i32
  }
}

</mosaic_0001>

<llo_original>
// kernel: attention_forward.5
$region0: #{attention_forward.5}
  #allocation0 [shape = 'u32[]', space=smem, size = 0x4, offset = 0x4, fixed_abs, tag = 'smem constant byte address 0x4 - core index']
  #allocation1 [shape = 'u32[144,128]{1,0:T(1,128)}', space=vmem, size = 0x12000, scoped, tag = 'internal scratch']
  #allocation2 [shape = 'f32[64,128]{1,0:T(8,128)}', space=vmem, size = 0x8000, scoped, tag = 'scratch operand']
  %s0 = inlined_call_operand.vmem [shape: f32[64,16], index: 0, kind: input, shape index: {}]
  %s1 = inlined_call_operand.vmem [shape: f32[16,1152], index: 1, kind: input, shape index: {}]
  %s2 = inlined_call_operand.vmem [shape: f32[64,1152], index: 2, kind: output, shape index: {}]
  %s3 = sld [smem:[#allocation0]]
  $region121: #{attention_forward.5} parent=0
    _
  %s5 = ssub.s32 1, %s3
  %s6 = scalar_select 0, %s5, %s3
  $region1: #{attention_forward.5} parent=0
    #allocation3 [shape = 'u8[16384]{0}', space=vmem, size = 0x4000, scoped, tag = 'input window, operand 1']
    #allocation4 [shape = 'u8[65536]{0}', space=vmem, size = 0x10000, scoped, tag = 'output window, operand 0']
    loop: start=0, step=1, limit=11
    $region2: #{attention_forward.5} parent=1 // loop_pre_header
      _
    $region3: #{attention_forward.5} parent=1 // loop_header
      %s8 = sphi 0, %s12
      %p9 = scmp.ge.s32.totalorder %s8, 11
      %s15 = sphi 0, %s34
      %s16 = sphi 0, %s30
      %s17 = sphi 0, %s26
      %s18 = sphi 0, %s15
      %s19 = sphi 0, %s16
      %s20 = sphi 0, %s17
      %s21 = sphi 0, %s18
      %s22 = sphi 0, %s19
      %s23 = sphi 0, %s20
      %s39 = sphi 0, %s41
      %s42 = sphi 0, %s39
      %s43 = sphi 0, %s42
      %s59 = sphi 0, %s43
      %s67 = sphi 0, %s69
      %s70 = sphi 0, %s67
      %s71 = sphi 0, %s70
      %s87 = sphi 0, %s71
      %s95 = sphi 0, %s97
      %s98 = sphi 0, %s95
      %s99 = sphi 0, %s98
      %s115 = sphi 0, %s99
    $region4: #{attention_forward.5} parent=1 // loop_header_branch
      %11 = sbr.rel (%p9) target = $region8
    $region5: #{attention_forward.5} parent=1 // loop_body
      %s13 = ssub.s32 %s8, 1
      %s14 = ssub.s32 %s8, 2
      %s24 = sadd.s32 1, %s17
      %p25 = scmp.ge.s32.totalorder %s24, 1
      %s26 = scalar_select %p25, 0, %s24
      %s27 = sadd.s32 1, %s16
      %s28 = scalar_select %p25, %s27, %s16
      %p29 = scmp.ge.s32.totalorder %s28, 9
      %s30 = scalar_select %p29, 0, %s28
      %s31 = sadd.s32 1, %s15
      %s32 = scalar_select %p29, %s31, %s15
      %p33 = scmp.ge.s32.totalorder %s32, 1
      %s34 = scalar_select %p33, 0, %s32
      %s35 = ssub.s32 %s15, %s34
      %s36 = ssub.s32 %s17, %s26
      %s37 = sor.u32 %s35, %s36
      %p38 = scmp.eq.s32.totalorder %s37, 0
      %s40 = sadd.s32 %s39, 1
      %s41 = scalar_select %p38, %s39, %s40
      %p44 = pneg %p38
      %p45 = scmp.eq.s32.totalorder %s8, 8
      %p46 = por %p44, %p45
      %p47 = scmp.ne.s32.totalorder %s39, %s42
      %p48 = scmp.eq.s32.totalorder %s8, 0
      %p49 = por %p47, %p48
      %p50 = scmp.ne.s32.totalorder %s39, %s42
      %p51 = scmp.eq.s32.totalorder %s13, 8
      %p52 = por %p50, %p51
      %p53 = scmp.ne.s32.totalorder %s42, %s43
      %p54 = scmp.eq.s32.totalorder %s13, 0
      %p55 = por %p53, %p54
      %p56 = scmp.ne.s32.totalorder %s42, %s43
      %p57 = scmp.eq.s32.totalorder %s14, 8
      %p58 = por %p56, %p57
      %p60 = scmp.ne.s32.totalorder %s43, %s59
      %p61 = scmp.eq.s32.totalorder %s14, 0
      %p62 = por %p60, %p61
      %s63 = ssub.s32 %s17, %s26
      %s64 = ssub.s32 %s16, %s30
      %s65 = sor.u32 %s63, %s64
      %p66 = scmp.eq.s32.totalorder %s65, 0
      %s68 = sadd.s32 %s67, 1
      %s69 = scalar_select %p66, %s67, %s68
      %p72 = pneg %p66
      %p73 = scmp.eq.s32.totalorder %s8, 8
      %p74 = por %p72, %p73
      %p75 = scmp.ne.s32.totalorder %s67, %s70
      %p76 = scmp.eq.s32.totalorder %s8, 0
      %p77 = por %p75, %p76
      %p78 = scmp.ne.s32.totalorder %s67, %s70
      %p79 = scmp.eq.s32.totalorder %s13, 8
      %p80 = por %p78, %p79
      %p81 = scmp.ne.s32.totalorder %s70, %s71
      %p82 = scmp.eq.s32.totalorder %s13, 0
      %p83 = por %p81, %p82
      %p84 = scmp.ne.s32.totalorder %s70, %s71
      %p85 = scmp.eq.s32.totalorder %s14, 8
      %p86 = por %p84, %p85
      %p88 = scmp.ne.s32.totalorder %s71, %s87
      %p89 = scmp.eq.s32.totalorder %s14, 0
      %p90 = por %p88, %p89
      %s91 = ssub.s32 %s15, %s34
      %s92 = ssub.s32 %s16, %s30
      %s93 = sor.u32 %s91, %s92
      %p94 = scmp.eq.s32.totalorder %s93, 0
      %s96 = sadd.s32 %s95, 1
      %s97 = scalar_select %p94, %s95, %s96
      %p100 = pneg %p94
      %p101 = scmp.eq.s32.totalorder %s8, 8
      %p102 = por %p100, %p101
      %p103 = scmp.ne.s32.totalorder %s95, %s98
      %p104 = scmp.eq.s32.totalorder %s8, 0
      %p105 = por %p103, %p104
      %p106 = scmp.ne.s32.totalorder %s95, %s98
      %p107 = scmp.eq.s32.totalorder %s13, 8
      %p108 = por %p106, %p107
      %p109 = scmp.ne.s32.totalorder %s98, %s99
      %p110 = scmp.eq.s32.totalorder %s13, 0
      %p111 = por %p109, %p110
      %p112 = scmp.ne.s32.totalorder %s98, %s99
      %p113 = scmp.eq.s32.totalorder %s14, 8
      %p114 = por %p112, %p113
      %p116 = scmp.ne.s32.totalorder %s99, %s115
      %p117 = scmp.eq.s32.totalorder %s14, 0
      %p118 = por %p116, %p117
      %p119 = scmp.le.s32.totalorder 1, %s8
      %p120 = scmp.lt.s32.totalorder %s8, 10
      %p121 = pnand %p119, %p120
      %p122 = pneg %p121
      // Predicated region
      $region9: #{attention_forward.5} parent=5 // pred_check
        _
      $region10: #{attention_forward.5} parent=5 // pred_check_branch
        %124 = sbr.rel (%p121) target = $region12
      $region11: #{attention_forward.5} parent=5 // pred_region
        %s125 = ssub.s32 %s8, 1
        // Predicated region
        $region13: #{attention_forward.5} parent=11 // pred_check
          %p126 = pneg %p55
        $region14: #{attention_forward.5} parent=11 // pred_check_branch
          %128 = sbr.rel (%p126) target = $region16
        $region15: #{attention_forward.5} parent=11 // pred_region
          %s129 = smul.u32 8, %s18
          %p130 = scmp.lt.s32.totalorder %s129, 7
          %s131 = scalar_select %p130, %s129, 7
          %p132 = scmp.lt.s32.totalorder %s20, 0
          %s133 = scalar_select %p132, %s20, 0
          %s134 = sadd.s32 %s133, %s131
          %s135 = smul.addr %s134, 8
          %s136 = scalar_lea.vmem %s0, %s135
          %s137 = smul.u32 8, %s18
        $region16: #{attention_forward.5} parent=11 // pred_fallthru
          _
      $region12: #{attention_forward.5} parent=5 // pred_fallthru
        _
      %p138 = scmp.lt.s32.totalorder %s8, 9
      // Predicated region
      $region17: #{attention_forward.5} parent=5 // pred_check
        %p139 = pneg %p138
      $region18: #{attention_forward.5} parent=5 // pred_check_branch
        %141 = sbr.rel (%p139) target = $region20
      $region19: #{attention_forward.5} parent=5 // pred_region
        // Predicated region
        $region21: #{attention_forward.5} parent=19 // pred_check
          %p142 = pneg %p77
        $region22: #{attention_forward.5} parent=19 // pred_check_branch
          %144 = sbr.rel (%p142) target = $region24
        $region23: #{attention_forward.5} parent=19 // pred_region
          %s145 = sand.u32 %s67, 1
          %s146 = sand.u32 %s67, 1
          %s147 = smul.addr %s146, 16
          %s148 = scalar_lea.vmem [#allocation3], %s147
          %s149 = smul.u32 2, %s17
          %s150 = smul.addr %s149, 9
          %s151 = sadd.s32 %s16, %s150
          %s152 = smul.addr %s151, 8
          %s153 = scalar_lea.vmem %s1, %s152
          // Predicated region
          $region25: #{attention_forward.5} parent=23 // pred_check
            _
          $region26: #{attention_forward.5} parent=23 // pred_check_branch
            %155 = sbr.rel (0) target = $region28
          $region27: #{attention_forward.5} parent=23 // pred_region
            // Predicated region
            $region29: #{attention_forward.5} parent=27 // pred_check
              _
            $region30: #{attention_forward.5} parent=27 // pred_check_branch
              %157 = sbr.rel (0) target = $region32
            $region31: #{attention_forward.5} parent=27 // pred_region
              // Predicated region
              $region44: #{attention_forward.5} parent=31 // pred_check
                _
              $region45: #{attention_forward.5} parent=31 // pred_check_branch
                %175 = sbr.rel (0) target = $region47
              $region46: #{attention_forward.5} parent=31 // pred_region
                loop: start=0, step=1, limit=1
                $region48: #{attention_forward.5} parent=46 // loop_pre_header
                  _
                $region49: #{attention_forward.5} parent=46 // loop_header
                  %s177 = sphi 0, %s181
                  %p178 = scmp.ge.s32.totalorder %s177, 1
                  %s182 = sphi %s153, %s153
                  %s183 = sphi %s148, %s148
                $region50: #{attention_forward.5} parent=46 // loop_header_branch
                  %180 = sbr.rel (%p178) target = $region54
                $region51: #{attention_forward.5} parent=46 // loop_body
                  %v184 = vld [vmem:[%s182] sm:$0xff]
                  %185 = vst [vmem:[%s183] sm:$0xff] %v184
                  %v186 = vld [vmem:[%s182 + $0x48] sm:$0xff]
                  %187 = vst [vmem:[%s183 + $0x8] sm:$0xff] %v186
                $region52: #{attention_forward.5} parent=46 // loop_footer
                  %s181 = sadd.s32 1, %s177
                $region53: #{attention_forward.5} parent=46 // loop_footer_branch
                  %176 = sbr.rel target = $region49
                $region54: #{attention_forward.5} parent=46 // loop_exit
                  _
              $region47: #{attention_forward.5} parent=31 // pred_fallthru
                _
              // Predicated region
              $region55: #{attention_forward.5} parent=31 // pred_check
                _
              $region56: #{attention_forward.5} parent=31 // pred_check_branch
                %189 = sbr.rel target = $region58
              $region57: #{attention_forward.5} parent=31 // pred_region
                _
              $region58: #{attention_forward.5} parent=31 // pred_fallthru
                _
            $region32: #{attention_forward.5} parent=27 // pred_fallthru
              _
            // Predicated region
            $region33: #{attention_forward.5} parent=27 // pred_check
              _
            $region34: #{attention_forward.5} parent=27 // pred_check_branch
              %159 = sbr.rel target = $region36
            $region35: #{attention_forward.5} parent=27 // pred_region
              %s161 = ssub.s32 256, 1
              loop: start=0, step=1, limit=1
              $region37: #{attention_forward.5} parent=35 // loop_pre_header
                _
              $region38: #{attention_forward.5} parent=35 // loop_header
                %s163 = sphi 0, %s167
                %p164 = scmp.ge.s32.totalorder %s163, 1
                %s168 = sphi %s153, %s153
                %s169 = sphi %s148, %s148
              $region39: #{attention_forward.5} parent=35 // loop_header_branch
                %166 = sbr.rel (%p164) target = $region43
              $region40: #{attention_forward.5} parent=35 // loop_body
                %v170 = vld [vmem:[%s168] sm:%s161]
                %171 = vst [vmem:[%s169] sm:%s161] %v170
                %v172 = vld [vmem:[%s168 + $0x48] sm:%s161]
                %173 = vst [vmem:[%s169 + $0x8] sm:%s161] %v172
              $region41: #{attention_forward.5} parent=35 // loop_footer
                %s167 = sadd.s32 1, %s163
              $region42: #{attention_forward.5} parent=35 // loop_footer_branch
                %162 = sbr.rel target = $region38
              $region43: #{attention_forward.5} parent=35 // loop_exit
                _
            $region36: #{attention_forward.5} parent=27 // pred_fallthru
              _
          $region28: #{attention_forward.5} parent=23 // pred_fallthru
            _
          %190 = vnop
        $region24: #{attention_forward.5} parent=19 // pred_fallthru
          _
      $region20: #{attention_forward.5} parent=5 // pred_fallthru
        _
      %p191 = scmp.le.s32.totalorder 1, %s8
      %p192 = scmp.lt.s32.totalorder %s8, 10
      %p193 = pnand %p191, %p192
      %p194 = pneg %p193
      // Predicated region
      $region59: #{attention_forward.5} parent=5 // pred_check
        _
      $region60: #{attention_forward.5} parent=5 // pred_check_branch
        %196 = sbr.rel (%p193) target = $region62
      $region61: #{attention_forward.5} parent=5 // pred_region
        %s197 = ssub.s32 %s8, 1
        %s198 = sand.u32 %s70, 1
        %s199 = sand.u32 %s70, 1
        %s200 = smul.addr %s199, 16
        %s201 = scalar_lea.vmem [#allocation3], %s200
        // Predicated region
        $region63: #{attention_forward.5} parent=61 // pred_check
          %p202 = pneg %p83
        $region64: #{attention_forward.5} parent=61 // pred_check_branch
          %204 = sbr.rel (%p202) target = $region66
        $region65: #{attention_forward.5} parent=61 // pred_region
          _
        $region66: #{attention_forward.5} parent=61 // pred_fallthru
          _
        %s205 = smul.u32 8, %s18
        %p206 = scmp.lt.s32.totalorder %s205, 7
        %s207 = scalar_select %p206, %s205, 7
        %p208 = scmp.lt.s32.totalorder %s20, 0
        %s209 = scalar_select %p208, %s20, 0
        %s210 = sadd.s32 %s209, %s207
        %s211 = smul.addr %s210, 8
        %s212 = scalar_lea.vmem %s0, %s211
        %p213 = pneg %p55
        %p214 = pneg %p52
        %s215 = sand.u32 %s70, 1
        %s216 = sand.u32 %s70, 1
        %s217 = smul.addr %s216, 16
        %s218 = scalar_lea.vmem [#allocation3], %s217
        %p219 = pneg %p83
        %p220 = pneg %p80
        %p221 = pneg %p111
        %p222 = pneg %p108
        %s223 = sand.u32 %s98, 1
        %s224 = sand.u32 %s98, 1
        %s225 = smul.addr %s224, 64
        %s226 = scalar_lea.vmem [#allocation4], %s225
        %s227 = smul.u32 8, %s18
        %p228 = scmp.lt.s32.totalorder %s227, 7
        %s229 = scalar_select %p228, %s227, 7
        %p230 = scmp.lt.s32.totalorder %s20, 0
        %s231 = scalar_select %p230, %s20, 0
        %s232 = sadd.s32 %s231, %s229
        %s233 = smul.addr %s232, 8
        %s234 = scalar_lea.vmem %s0, %s233
        %s235 = smul.u32 8, %s18
        %s236 = smul.u32 2, %s20
        %s237 = smul.u32 8, %s18
        %p238 = scmp.eq.s32.totalorder %s20, 0
        // Predicated region
        $region67: #{attention_forward.5} parent=61 // pred_check
          %p239 = pneg %p238
        $region68: #{attention_forward.5} parent=61 // pred_check_branch
          %241 = sbr.rel (%p239) target = $region70
        $region69: #{attention_forward.5} parent=61 // pred_region
          %242 = vst [vmem:[#allocation2] sm:$0xff] 0.0
          %243 = vst [vmem:[#allocation2 + $0x8] sm:$0xff] 0.0
          %244 = vst [vmem:[#allocation2 + $0x10] sm:$0xff] 0.0
          %245 = vst [vmem:[#allocation2 + $0x18] sm:$0xff] 0.0
          %246 = vst [vmem:[#allocation2 + $0x20] sm:$0xff] 0.0
          %247 = vst [vmem:[#allocation2 + $0x28] sm:$0xff] 0.0
          %248 = vst [vmem:[#allocation2 + $0x30] sm:$0xff] 0.0
          %249 = vst [vmem:[#allocation2 + $0x38] sm:$0xff] 0.0
        $region70: #{attention_forward.5} parent=61 // pred_fallthru
          _
        %v250 = vld [vmem:[#allocation2] sm:$0xff]
        %v251 = vld [vmem:[#allocation2 + $0x8] sm:$0xff]
        %v252 = vld [vmem:[#allocation2 + $0x10] sm:$0xff]
        %v253 = vld [vmem:[#allocation2 + $0x18] sm:$0xff]
        %v254 = vld [vmem:[#allocation2 + $0x20] sm:$0xff]
        %v255 = vld [vmem:[#allocation2 + $0x28] sm:$0xff]
        %v256 = vld [vmem:[#allocation2 + $0x30] sm:$0xff]
        %v257 = vld [vmem:[#allocation2 + $0x38] sm:$0xff]
        %v258 = vld [vmem:[%s234] sm:$0xff]
        %v259 = vld [vmem:[%s234 + $0x8] sm:$0xff]
        %v260 = vld [vmem:[%s234 + $0x10] sm:$0xff]
        %v261 = vld [vmem:[%s234 + $0x18] sm:$0xff]
        %v262 = vld [vmem:[%s234 + $0x20] sm:$0xff]
        %v263 = vld [vmem:[%s234 + $0x28] sm:$0xff]
        %v264 = vld [vmem:[%s234 + $0x30] sm:$0xff]
        %v265 = vld [vmem:[%s234 + $0x38] sm:$0xff]
        %v266 = vld [vmem:[%s201] sm:$0xff]
        %v267 = vld [vmem:[%s201 + $0x8] sm:$0xff]
        %vm268 = vcmask 130048
        %v270 = vsel %vm268, %v258, 0
        %v273 = vsel %vm268, %v259, 0
        %v276 = vsel %vm268, %v260, 0
        %v279 = vsel %vm268, %v261, 0
        %v282 = vsel %vm268, %v262, 0
        %v285 = vsel %vm268, %v263, 0
        %v288 = vsel %vm268, %v264, 0
        %v291 = vsel %vm268, %v265, 0
        %293 = vmatprep.subr.mxu0 0.0
        %294 = vmatpush1.msra.mxu0 0.0
        %295 = vmatprep.subr.mxu0 0.0
        %296 = vmatpush1.msra.mxu0 0.0
        %297 = vmatprep.subr.mxu0 0.0
        %298 = vmatpush1.msra.mxu0 0.0
        %299 = vmatprep.subr.mxu0 0.0
        %300 = vmatpush1.msra.mxu0 0.0
        %301 = vmatprep.subr.mxu0 0.0
        %302 = vmatpush1.msra.mxu0 0.0
        %303 = vmatprep.subr.mxu0 0.0
        %304 = vmatpush1.msra.mxu0 0.0
        %305 = vmatprep.subr.mxu0 0.0
        %306 = vmatpush1.msra.mxu0 0.0
        %307 = vmatprep.subr.mxu0 0.0
        %308 = vmatpush1.msra.mxu0 0.0
        %309 = vmatprep.subr.mxu0 0.0
        %310 = vmatpush1.msra.mxu0 0.0
        %311 = vmatprep.subr.mxu0 0.0
        %312 = vmatpush1.msra.mxu0 0.0
        %313 = vmatprep.subr.mxu0 0.0
        %314 = vmatpush1.msra.mxu0 0.0
        %315 = vmatprep.subr.mxu0 0.0
        %316 = vmatpush1.msra.mxu0 0.0
        %317 = vmatprep.subr.mxu0 0.0
        %318 = vmatpush1.msra.mxu0 0.0
        %319 = vmatprep.subr.mxu0 0.0
        %320 = vmatpush1.msra.mxu0 0.0
        %321 = vmatprep.subr.mxu0 0.0
        %322 = vmatpush1.msra.mxu0 %v267
        %323 = vmatprep.subr.mxu0 0.0
        %324 = vmatpush1.msra.mxu0 %v266
        %325 = vmatprep.subr.mxu0 0.0
        %326 = vmatpush2.msra.mxu0 0.0
        %327 = vmatprep.subr.mxu0 0.0
        %328 = vmatpush2.msra.mxu0 0.0
        %329 = vmatprep.subr.mxu0 0.0
        %330 = vmatpush2.msra.mxu0 0.0
        %331 = vmatprep.subr.mxu0 0.0
        %332 = vmatpush2.msra.mxu0 0.0
        %333 = vmatprep.subr.mxu0 0.0
        %334 = vmatpush2.msra.mxu0 0.0
        %335 = vmatprep.subr.mxu0 0.0
        %336 = vmatpush2.msra.mxu0 0.0
        %337 = vmatprep.subr.mxu0 0.0
        %338 = vmatpush2.msra.mxu0 0.0
        %339 = vmatprep.subr.mxu0 0.0
        %340 = vmatpush2.msra.mxu0 0.0
        %341 = vmatprep.subr.mxu0 0.0
        %342 = vmatpush2.msra.mxu0 0.0
        %343 = vmatprep.subr.mxu0 0.0
        %344 = vmatpush2.msra.mxu0 0.0
        %345 = vmatprep.subr.mxu0 0.0
        %346 = vmatpush2.msra.mxu0 0.0
        %347 = vmatprep.subr.mxu0 0.0
        %348 = vmatpush2.msra.mxu0 0.0
        %349 = vmatprep.subr.mxu0 0.0
        %350 = vmatpush2.msra.mxu0 0.0
        %351 = vmatprep.subr.mxu0 0.0
        %352 = vmatpush2.msra.mxu0 0.0
        %353 = vmatprep.subr.mxu0 0.0
        %354 = vmatpush2.msra.mxu0 0.0
        %355 = vmatprep.subr.mxu0 0.0
        %356 = vmatpush2.msra.mxu0 0.0
        %357 = vmatprep.mubr.f32.mxu0 0.0
        %358 = vmatmul.mubr.f32.gmra.mxu0 %v270
        %v359 = vpop.f32.mrf.mxu0
        %v360 = vadd.f32 0.0, %v359
        %v361 = vpop.f32.mrf.mxu0
        %362 = vmatprep.mubr.f32.mxu0 0.0
        %363 = vmatmul.mubr.f32.gmra.mxu0 %v273
        %v364 = vpop.f32.mrf.mxu0
        %v365 = vadd.f32 0.0, %v364
        %v366 = vpop.f32.mrf.mxu0
        %367 = vmatprep.mubr.f32.mxu0 0.0
        %368 = vmatmul.mubr.f32.gmra.mxu0 %v276
        %v369 = vpop.f32.mrf.mxu0
        %v370 = vadd.f32 0.0, %v369
        %v371 = vpop.f32.mrf.mxu0
        %372 = vmatprep.mubr.f32.mxu0 0.0
        %373 = vmatmul.mubr.f32.gmra.mxu0 %v279
        %v374 = vpop.f32.mrf.mxu0
        %v375 = vadd.f32 0.0, %v374
        %v376 = vpop.f32.mrf.mxu0
        %377 = vmatprep.mubr.f32.mxu0 0.0
        %378 = vmatmul.mubr.f32.gmra.mxu0 %v282
        %v379 = vpop.f32.mrf.mxu0
        %v380 = vadd.f32 0.0, %v379
        %v381 = vpop.f32.mrf.mxu0
        %382 = vmatprep.mubr.f32.mxu0 0.0
        %383 = vmatmul.mubr.f32.gmra.mxu0 %v285
        %v384 = vpop.f32.mrf.mxu0
        %v385 = vadd.f32 0.0, %v384
        %v386 = vpop.f32.mrf.mxu0
        %387 = vmatprep.mubr.f32.mxu0 0.0
        %388 = vmatmul.mubr.f32.gmra.mxu0 %v288
        %v389 = vpop.f32.mrf.mxu0
        %v390 = vadd.f32 0.0, %v389
        %v391 = vpop.f32.mrf.mxu0
        %392 = vmatprep.mubr.f32.mxu0 0.0
        %393 = vmatmul.mubr.f32.gmra.mxu0 %v291
        %v394 = vpop.f32.mrf.mxu0
        %v395 = vadd.f32 0.0, %v394
        %v396 = vpop.f32.mrf.mxu0
        %397 = vdwg.mxu0
        %v398 = vadd.f32 %v250, %v360
        %v399 = vadd.f32 %v251, %v365
        %v400 = vadd.f32 %v252, %v370
        %v401 = vadd.f32 %v253, %v375
        %v402 = vadd.f32 %v254, %v380
        %v403 = vadd.f32 %v255, %v385
        %v404 = vadd.f32 %v256, %v390
        %v405 = vadd.f32 %v257, %v395
        %406 = vst [vmem:[#allocation2] sm:$0xff] %v398
        %407 = vst [vmem:[#allocation2 + $0x8] sm:$0xff] %v399
        %408 = vst [vmem:[#allocation2 + $0x10] sm:$0xff] %v400
        %409 = vst [vmem:[#allocation2 + $0x18] sm:$0xff] %v401
        %410 = vst [vmem:[#allocation2 + $0x20] sm:$0xff] %v402
        %411 = vst [vmem:[#allocation2 + $0x28] sm:$0xff] %v403
        %412 = vst [vmem:[#allocation2 + $0x30] sm:$0xff] %v404
        %413 = vst [vmem:[#allocation2 + $0x38] sm:$0xff] %v405
        // Predicated region
        $region71: #{attention_forward.5} parent=61 // pred_check
          %p414 = pneg %p238
        $region72: #{attention_forward.5} parent=61 // pred_check_branch
          %416 = sbr.rel (%p414) target = $region74
        $region73: #{attention_forward.5} parent=61 // pred_region
          %v417 = vld [vmem:[#allocation2] sm:$0xff]
          %v418 = vld [vmem:[#allocation2 + $0x8] sm:$0xff]
          %v419 = vld [vmem:[#allocation2 + $0x10] sm:$0xff]
          %v420 = vld [vmem:[#allocation2 + $0x18] sm:$0xff]
          %v421 = vld [vmem:[#allocation2 + $0x20] sm:$0xff]
          %v422 = vld [vmem:[#allocation2 + $0x28] sm:$0xff]
          %v423 = vld [vmem:[#allocation2 + $0x30] sm:$0xff]
          %v424 = vld [vmem:[#allocation2 + $0x38] sm:$0xff]
          %425 = vst [vmem:[%s226] sm:$0xff] %v417
          %426 = vst [vmem:[%s226 + $0x8] sm:$0xff] %v418
          %427 = vst [vmem:[%s226 + $0x10] sm:$0xff] %v419
          %428 = vst [vmem:[%s226 + $0x18] sm:$0xff] %v420
          %429 = vst [vmem:[%s226 + $0x20] sm:$0xff] %v421
          %430 = vst [vmem:[%s226 + $0x28] sm:$0xff] %v422
          %431 = vst [vmem:[%s226 + $0x30] sm:$0xff] %v423
          %432 = vst [vmem:[%s226 + $0x38] sm:$0xff] %v424
        $region74: #{attention_forward.5} parent=61 // pred_fallthru
          _
        %s433 = sand.u32 %s98, 1
        %s434 = sand.u32 %s98, 1
        %s435 = smul.addr %s434, 64
        %s436 = scalar_lea.vmem [#allocation4], %s435
        // Predicated region
        $region75: #{attention_forward.5} parent=61 // pred_check
          %p437 = pneg %p108
        $region76: #{attention_forward.5} parent=61 // pred_check_branch
          %439 = sbr.rel (%p437) target = $region78
        $region77: #{attention_forward.5} parent=61 // pred_region
          %s440 = smul.u32 8, %s18
          %s441 = smul.addr %s440, 9
          %s442 = sadd.s32 %s19, %s441
          %s443 = smul.addr %s442, 8
          %s444 = scalar_lea.vmem %s2, %s443
          // Predicated region
          $region79: #{attention_forward.5} parent=77 // pred_check
            _
          $region80: #{attention_forward.5} parent=77 // pred_check_branch
            %446 = sbr.rel (0) target = $region82
          $region81: #{attention_forward.5} parent=77 // pred_region
            // Predicated region
            $region83: #{attention_forward.5} parent=81 // pred_check
              _
            $region84: #{attention_forward.5} parent=81 // pred_check_branch
              %448 = sbr.rel (0) target = $region86
            $region85: #{attention_forward.5} parent=81 // pred_region
              // Predicated region
              $region98: #{attention_forward.5} parent=85 // pred_check
                _
              $region99: #{attention_forward.5} parent=85 // pred_check_branch
                %478 = sbr.rel (0) target = $region101
              $region100: #{attention_forward.5} parent=85 // pred_region
                loop: start=0, step=1, limit=1
                $region102: #{attention_forward.5} parent=100 // loop_pre_header
                  _
                $region103: #{attention_forward.5} parent=100 // loop_header
                  %s480 = sphi 0, %s484
                  %p481 = scmp.ge.s32.totalorder %s480, 1
                  %s485 = sphi %s436, %s436
                  %s486 = sphi %s444, %s444
                $region104: #{attention_forward.5} parent=100 // loop_header_branch
                  %483 = sbr.rel (%p481) target = $region108
                $region105: #{attention_forward.5} parent=100 // loop_body
                  %v487 = vld [vmem:[%s485] sm:$0xff]
                  %488 = vst [vmem:[%s486] sm:$0xff] %v487
                  %v489 = vld [vmem:[%s485 + $0x8] sm:$0xff]
                  %490 = vst [vmem:[%s486 + $0x48] sm:$0xff] %v489
                  %v491 = vld [vmem:[%s485 + $0x10] sm:$0xff]
                  %492 = vst [vmem:[%s486 + $0x90] sm:$0xff] %v491
                  %v493 = vld [vmem:[%s485 + $0x18] sm:$0xff]
                  %494 = vst [vmem:[%s486 + $0xd8] sm:$0xff] %v493
                  %v495 = vld [vmem:[%s485 + $0x20] sm:$0xff]
                  %496 = vst [vmem:[%s486 + $0x120] sm:$0xff] %v495
                  %v497 = vld [vmem:[%s485 + $0x28] sm:$0xff]
                  %498 = vst [vmem:[%s486 + $0x168] sm:$0xff] %v497
                  %v499 = vld [vmem:[%s485 + $0x30] sm:$0xff]
                  %500 = vst [vmem:[%s486 + $0x1b0] sm:$0xff] %v499
                  %v501 = vld [vmem:[%s485 + $0x38] sm:$0xff]
                  %502 = vst [vmem:[%s486 + $0x1f8] sm:$0xff] %v501
                $region106: #{attention_forward.5} parent=100 // loop_footer
                  %s484 = sadd.s32 1, %s480
                $region107: #{attention_forward.5} parent=100 // loop_footer_branch
                  %479 = sbr.rel target = $region103
                $region108: #{attention_forward.5} parent=100 // loop_exit
                  _
              $region101: #{attention_forward.5} parent=85 // pred_fallthru
                _
              // Predicated region
              $region109: #{attention_forward.5} parent=85 // pred_check
                _
              $region110: #{attention_forward.5} parent=85 // pred_check_branch
                %504 = sbr.rel target = $region112
              $region111: #{attention_forward.5} parent=85 // pred_region
                _
              $region112: #{attention_forward.5} parent=85 // pred_fallthru
                _
            $region86: #{attention_forward.5} parent=81 // pred_fallthru
              _
            // Predicated region
            $region87: #{attention_forward.5} parent=81 // pred_check
              _
            $region88: #{attention_forward.5} parent=81 // pred_check_branch
              %450 = sbr.rel target = $region90
            $region89: #{attention_forward.5} parent=81 // pred_region
              %s452 = ssub.s32 256, 1
              loop: start=0, step=1, limit=1
              $region91: #{attention_forward.5} parent=89 // loop_pre_header
                _
              $region92: #{attention_forward.5} parent=89 // loop_header
                %s454 = sphi 0, %s458
                %p455 = scmp.ge.s32.totalorder %s454, 1
                %s459 = sphi %s436, %s436
                %s460 = sphi %s444, %s444
              $region93: #{attention_forward.5} parent=89 // loop_header_branch
                %457 = sbr.rel (%p455) target = $region97
              $region94: #{attention_forward.5} parent=89 // loop_body
                %v461 = vld [vmem:[%s459] sm:%s452]
                %462 = vst [vmem:[%s460] sm:%s452] %v461
                %v463 = vld [vmem:[%s459 + $0x8] sm:%s452]
                %464 = vst [vmem:[%s460 + $0x48] sm:%s452] %v463
                %v465 = vld [vmem:[%s459 + $0x10] sm:%s452]
                %466 = vst [vmem:[%s460 + $0x90] sm:%s452] %v465
                %v467 = vld [vmem:[%s459 + $0x18] sm:%s452]
                %468 = vst [vmem:[%s460 + $0xd8] sm:%s452] %v467
                %v469 = vld [vmem:[%s459 + $0x20] sm:%s452]
                %470 = vst [vmem:[%s460 + $0x120] sm:%s452] %v469
                %v471 = vld [vmem:[%s459 + $0x28] sm:%s452]
                %472 = vst [vmem:[%s460 + $0x168] sm:%s452] %v471
                %v473 = vld [vmem:[%s459 + $0x30] sm:%s452]
                %474 = vst [vmem:[%s460 + $0x1b0] sm:%s452] %v473
                %v475 = vld [vmem:[%s459 + $0x38] sm:%s452]
                %476 = vst [vmem:[%s460 + $0x1f8] sm:%s452] %v475
              $region95: #{attention_forward.5} parent=89 // loop_footer
                %s458 = sadd.s32 1, %s454
              $region96: #{attention_forward.5} parent=89 // loop_footer_branch
                %453 = sbr.rel target = $region92
              $region97: #{attention_forward.5} parent=89 // loop_exit
                _
            $region90: #{attention_forward.5} parent=81 // pred_fallthru
              _
          $region82: #{attention_forward.5} parent=77 // pred_fallthru
            _
          %505 = vnop
        $region78: #{attention_forward.5} parent=61 // pred_fallthru
          _
      $region62: #{attention_forward.5} parent=5 // pred_fallthru
        _
      %p506 = scmp.le.s32.totalorder 2, %s8
      // Predicated region
      $region113: #{attention_forward.5} parent=5 // pred_check
        %p507 = pneg %p506
      $region114: #{attention_forward.5} parent=5 // pred_check_branch
        %509 = sbr.rel (%p507) target = $region116
      $region115: #{attention_forward.5} parent=5 // pred_region
        %s510 = ssub.s32 %s8, 2
        // Predicated region
        $region117: #{attention_forward.5} parent=115 // pred_check
          %p511 = pneg %p114
        $region118: #{attention_forward.5} parent=115 // pred_check_branch
          %513 = sbr.rel (%p511) target = $region120
        $region119: #{attention_forward.5} parent=115 // pred_region
          %s514 = sand.u32 %s99, 1
          %s515 = sand.u32 %s99, 1
          %s516 = smul.addr %s515, 64
          %s517 = scalar_lea.vmem [#allocation4], %s516
        $region120: #{attention_forward.5} parent=115 // pred_fallthru
          _
      $region116: #{attention_forward.5} parent=5 // pred_fallthru
        _
    $region6: #{attention_forward.5} parent=1 // loop_footer
      %s12 = sadd.s32 1, %s8
    $region7: #{attention_forward.5} parent=1 // loop_footer_branch
      %7 = sbr.rel target = $region3
    $region8: #{attention_forward.5} parent=1 // loop_exit
      _

// kernel: attention_forward.4
$region0: #{attention_forward.4}
  #allocation0 [shape = 'u32[]', space=smem, size = 0x4, offset = 0x4, fixed_abs, tag = 'smem constant byte address 0x4 - core index']
  #allocation1 [shape = 'u32[144,128]{1,0:T(1,128)}', space=vmem, size = 0x12000, scoped, tag = 'internal scratch']
  #allocation2 [shape = 'f32[16,192]{1,0:T(8,128)}', space=vmem, size = 0x4000, scoped, tag = 'scratch operand']
  %s0 = inlined_call_operand.vmem [shape: f32[16,32], index: 0, kind: input, shape index: {}]
  %s1 = inlined_call_operand.vmem [shape: f32[32,192], index: 1, kind: input, shape index: {}]
  %s2 = inlined_call_operand.vmem [shape: f32[16,192], index: 2, kind: output, shape index: {}]
  %s3 = sld [smem:[#allocation0]]
  $region26: #{attention_forward.4} parent=0
    _
  %s5 = ssub.s32 1, %s3
  %s6 = scalar_select 0, %s5, %s3
  // Predicated region
  $region2: #{attention_forward.4} parent=0 // pred_check
    _
  $region3: #{attention_forward.4} parent=0 // pred_check_branch
    %8 = sbr.rel (0) target = $region5
  $region4: #{attention_forward.4} parent=0 // pred_region
    _
  $region5: #{attention_forward.4} parent=0 // pred_fallthru
    _
  // Predicated region
  $region6: #{attention_forward.4} parent=0 // pred_check
    _
  $region7: #{attention_forward.4} parent=0 // pred_check_branch
    %10 = sbr.rel (0) target = $region9
  $region8: #{attention_forward.4} parent=0 // pred_region
    _
  $region9: #{attention_forward.4} parent=0 // pred_fallthru
    _
  %p11 = scmp.eq.s32.totalorder 0, 0
  // Predicated region
  $region10: #{attention_forward.4} parent=0 // pred_check
    %p12 = pneg %p11
  $region11: #{attention_forward.4} parent=0 // pred_check_branch
    %14 = sbr.rel (%p12) target = $region13
  $region12: #{attention_forward.4} parent=0 // pred_region
    %15 = vst [vmem:[#allocation2] sm:$0xff] 0.0
    %vm16 = vcmask 523264
    %17 = vst.msk [vmem:[#allocation2 + $0x8] sm:$0xff] %vm16, 0.0
    %18 = vst [vmem:[#allocation2 + $0x10] sm:$0xff] 0.0
    %19 = vst.msk [vmem:[#allocation2 + $0x18] sm:$0xff] %vm16, 0.0
  $region13: #{attention_forward.4} parent=0 // pred_fallthru
    _
  %v20 = vld [vmem:[#allocation2] sm:$0xff]
  %v21 = vld [vmem:[#allocation2 + $0x8] sm:$0xff]
  %v22 = vld [vmem:[#allocation2 + $0x10] sm:$0xff]
  %v23 = vld [vmem:[#allocation2 + $0x18] sm:$0xff]
  %v24 = vld [vmem:[%s0] sm:$0xff]
  %v25 = vld [vmem:[%s0 + $0x8] sm:$0xff]
  %v26 = vld [vmem:[%s1] sm:$0xff]
  %v27 = vld [vmem:[%s1 + $0x8] sm:$0xff]
  %v28 = vld [vmem:[%s1 + $0x10] sm:$0xff]
  %v29 = vld [vmem:[%s1 + $0x18] sm:$0xff]
  %v30 = vld [vmem:[%s1 + $0x20] sm:$0xff]
  %v31 = vld [vmem:[%s1 + $0x28] sm:$0xff]
  %v32 = vld [vmem:[%s1 + $0x30] sm:$0xff]
  %v33 = vld [vmem:[%s1 + $0x38] sm:$0xff]
  %vm34 = vcmask 261120
  %v36 = vsel %vm34, %v24, 0
  %v39 = vsel %vm34, %v25, 0
  %41 = vmatprep.subr.mxu0 0.0
  %42 = vmatpush1.msra.mxu0 0.0
  %43 = vmatprep.subr.mxu0 0.0
  %44 = vmatpush1.msra.mxu0 0.0
  %45 = vmatprep.subr.mxu0 0.0
  %46 = vmatpush1.msra.mxu0 0.0
  %47 = vmatprep.subr.mxu0 0.0
  %48 = vmatpush1.msra.mxu0 0.0
  %49 = vmatprep.subr.mxu0 0.0
  %50 = vmatpush1.msra.mxu0 0.0
  %51 = vmatprep.subr.mxu0 0.0
  %52 = vmatpush1.msra.mxu0 0.0
  %53 = vmatprep.subr.mxu0 0.0
  %54 = vmatpush1.msra.mxu0 0.0
  %55 = vmatprep.subr.mxu0 0.0
  %56 = vmatpush1.msra.mxu0 0.0
  %57 = vmatprep.subr.mxu0 0.0
  %58 = vmatpush1.msra.mxu0 0.0
  %59 = vmatprep.subr.mxu0 0.0
  %60 = vmatpush1.msra.mxu0 0.0
  %61 = vmatprep.subr.mxu0 0.0
  %62 = vmatpush1.msra.mxu0 0.0
  %63 = vmatprep.subr.mxu0 0.0
  %64 = vmatpush1.msra.mxu0 0.0
  %65 = vmatprep.subr.mxu0 %v33
  %66 = vmatpush1.msra.mxu0 %v32
  %67 = vmatprep.subr.mxu0 %v31
  %68 = vmatpush1.msra.mxu0 %v30
  %69 = vmatprep.subr.mxu0 %v29
  %70 = vmatpush1.msra.mxu0 %v28
  %71 = vmatprep.subr.mxu0 %v27
  %72 = vmatpush1.msra.mxu0 %v26
  %73 = vmatprep.subr.mxu0 0.0
  %74 = vmatpush2.msra.mxu0 0.0
  %75 = vmatprep.subr.mxu0 0.0
  %76 = vmatpush2.msra.mxu0 0.0
  %77 = vmatprep.subr.mxu0 0.0
  %78 = vmatpush2.msra.mxu0 0.0
  %79 = vmatprep.subr.mxu0 0.0
  %80 = vmatpush2.msra.mxu0 0.0
  %81 = vmatprep.subr.mxu0 0.0
  %82 = vmatpush2.msra.mxu0 0.0
  %83 = vmatprep.subr.mxu0 0.0
  %84 = vmatpush2.msra.mxu0 0.0
  %85 = vmatprep.subr.mxu0 0.0
  %86 = vmatpush2.msra.mxu0 0.0
  %87 = vmatprep.subr.mxu0 0.0
  %88 = vmatpush2.msra.mxu0 0.0
  %89 = vmatprep.subr.mxu0 0.0
  %90 = vmatpush2.msra.mxu0 0.0
  %91 = vmatprep.subr.mxu0 0.0
  %92 = vmatpush2.msra.mxu0 0.0
  %93 = vmatprep.subr.mxu0 0.0
  %94 = vmatpush2.msra.mxu0 0.0
  %95 = vmatprep.subr.mxu0 0.0
  %96 = vmatpush2.msra.mxu0 0.0
  %97 = vmatprep.subr.mxu0 0.0
  %98 = vmatpush2.msra.mxu0 0.0
  %99 = vmatprep.subr.mxu0 0.0
  %100 = vmatpush2.msra.mxu0 0.0
  %101 = vmatprep.subr.mxu0 0.0
  %102 = vmatpush2.msra.mxu0 0.0
  %103 = vmatprep.subr.mxu0 0.0
  %104 = vmatpush2.msra.mxu0 0.0
  %105 = vmatprep.mubr.f32.mxu0 0.0
  %106 = vmatmul.mubr.f32.gmra.mxu0 %v36
  %v107 = vpop.f32.mrf.mxu0
  %v108 = vadd.f32 0.0, %v107
  %v109 = vpop.f32.mrf.mxu0
  %v110 = vadd.f32 0.0, %v109
  %111 = vmatprep.mubr.f32.mxu0 0.0
  %112 = vmatmul.mubr.f32.gmra.mxu0 %v39
  %v113 = vpop.f32.mrf.mxu0
  %v114 = vadd.f32 0.0, %v113
  %v115 = vpop.f32.mrf.mxu0
  %v116 = vadd.f32 0.0, %v115
  %117 = vdwg.mxu0
  %v118 = vadd.f32 %v20, %v108
  %v119 = vadd.f32 %v21, %v110
  %v120 = vadd.f32 %v22, %v114
  %v121 = vadd.f32 %v23, %v116
  %122 = vst [vmem:[#allocation2] sm:$0xff] %v118
  %vm123 = vcmask 523264
  %124 = vst.msk [vmem:[#allocation2 + $0x8] sm:$0xff] %vm123, %v119
  %125 = vst [vmem:[#allocation2 + $0x10] sm:$0xff] %v120
  %126 = vst.msk [vmem:[#allocation2 + $0x18] sm:$0xff] %vm123, %v121
  // Predicated region
  $region14: #{attention_forward.4} parent=0 // pred_check
    %p127 = pneg %p11
  $region15: #{attention_forward.4} parent=0 // pred_check_branch
    %129 = sbr.rel (%p127) target = $region17
  $region16: #{attention_forward.4} parent=0 // pred_region
    %v130 = vld [vmem:[#allocation2] sm:$0xff]
    %v131 = vld [vmem:[#allocation2 + $0x8] sm:$0xff]
    %v132 = vld [vmem:[#allocation2 + $0x10] sm:$0xff]
    %v133 = vld [vmem:[#allocation2 + $0x18] sm:$0xff]
    %134 = vst [vmem:[%s2] sm:$0xff] %v130
    %135 = vst.msk [vmem:[%s2 + $0x8] sm:$0xff] %vm123, %v131
    %136 = vst [vmem:[%s2 + $0x10] sm:$0xff] %v132
    %137 = vst.msk [vmem:[%s2 + $0x18] sm:$0xff] %vm123, %v133
  $region17: #{attention_forward.4} parent=0 // pred_fallthru
    _
  // Predicated region
  $region18: #{attention_forward.4} parent=0 // pred_check
    _
  $region19: #{attention_forward.4} parent=0 // pred_check_branch
    %139 = sbr.rel (0) target = $region21
  $region20: #{attention_forward.4} parent=0 // pred_region
    _
  $region21: #{attention_forward.4} parent=0 // pred_fallthru
    _
  // Predicated region
  $region22: #{attention_forward.4} parent=0 // pred_check
    _
  $region23: #{attention_forward.4} parent=0 // pred_check_branch
    %141 = sbr.rel (0) target = $region25
  $region24: #{attention_forward.4} parent=0 // pred_region
    _
  $region25: #{attention_forward.4} parent=0 // pred_fallthru
    _

// kernel: attention_forward.6
$region0: #{attention_forward.6}
  #allocation0 [shape = 'u32[]', space=smem, size = 0x4, offset = 0x4, fixed_abs, tag = 'smem constant byte address 0x4 - core index']
  #allocation1 [shape = 'u32[144,128]{1,0:T(1,128)}', space=vmem, size = 0x12000, scoped, tag = 'internal scratch']
  #allocation2 [shape = 'f32[8,1]{1,0:T(8,128)}', space=vmem, size = 0x1000, scoped, tag = 'scratch operand']
  #allocation3 [shape = 'f32[8,1]{1,0:T(8,128)}', space=vmem, size = 0x1000, scoped, tag = 'scratch operand']
  #allocation4 [shape = 'f32[8,16]{1,0:T(8,128)}', space=vmem, size = 0x1000, scoped, tag = 'scratch operand']
  %s0 = inlined_call_operand.vmem [shape: f32[3,2,4,8,16], index: 0, kind: input, shape index: {}, may-alias: {0,1,2}]
  %s1 = inlined_call_operand.vmem [shape: f32[3,2,4,8,16], index: 1, kind: input, shape index: {}, may-alias: {0,1,2}]
  %s2 = inlined_call_operand.vmem [shape: f32[3,2,4,8,16], index: 2, kind: input, shape index: {}, may-alias: {0,1,2}]
  %s3 = inlined_call_operand.vmem [shape: f32[2,4,8,8], index: 3, kind: input, shape index: {}]
  %s4 = inlined_call_operand.vmem [shape: f32[2,4,8,16], index: 4, kind: output, shape index: {}]
  %s5 = sld [smem:[#allocation0]]
  $region57: #{attention_forward.6} parent=0
    _
  %s7 = ssub.s32 1, %s5
  %s8 = scalar_select 0, %s7, %s5
  loop: start=0, step=1, limit=10
  $region2: #{attention_forward.6} parent=0 // loop_pre_header
    _
  $region3: #{attention_forward.6} parent=0 // loop_header
    %s10 = sphi 0, %s14
    %p11 = scmp.ge.s32.totalorder %s10, 10
    %s17 = sphi 0, %s43
    %s18 = sphi 0, %s39
    %s19 = sphi 0, %s35
    %s20 = sphi 0, %s31
    %s21 = sphi 0, %s17
    %s22 = sphi 0, %s18
    %s23 = sphi 0, %s19
    %s24 = sphi 0, %s20
    %s25 = sphi 0, %s21
    %s26 = sphi 0, %s22
    %s27 = sphi 0, %s23
    %s28 = sphi 0, %s24
    %s50 = sphi 0, %s52
    %s53 = sphi 0, %s50
    %s54 = sphi 0, %s53
    %s70 = sphi 0, %s54
    %s80 = sphi 0, %s82
    %s83 = sphi 0, %s80
    %s84 = sphi 0, %s83
    %s100 = sphi 0, %s84
    %s110 = sphi 0, %s112
    %s113 = sphi 0, %s110
    %s114 = sphi 0, %s113
    %s130 = sphi 0, %s114
    %s142 = sphi 0, %s144
    %s145 = sphi 0, %s142
    %s146 = sphi 0, %s145
    %s162 = sphi 0, %s146
    %s172 = sphi 0, %s174
    %s175 = sphi 0, %s172
    %s176 = sphi 0, %s175
    %s192 = sphi 0, %s176
  $region4: #{attention_forward.6} parent=0 // loop_header_branch
    %13 = sbr.rel (%p11) target = $region8
  $region5: #{attention_forward.6} parent=0 // loop_body
    %s15 = ssub.s32 %s10, 1
    %s16 = ssub.s32 %s10, 2
    %s29 = sadd.s32 1, %s20
    %p30 = scmp.ge.s32.totalorder %s29, 1
    %s31 = scalar_select %p30, 0, %s29
    %s32 = sadd.s32 1, %s19
    %s33 = scalar_select %p30, %s32, %s19
    %p34 = scmp.ge.s32.totalorder %s33, 1
    %s35 = scalar_select %p34, 0, %s33
    %s36 = sadd.s32 1, %s18
    %s37 = scalar_select %p34, %s36, %s18
    %p38 = scmp.ge.s32.totalorder %s37, 4
    %s39 = scalar_select %p38, 0, %s37
    %s40 = sadd.s32 1, %s17
    %s41 = scalar_select %p38, %s40, %s17
    %p42 = scmp.ge.s32.totalorder %s41, 2
    %s43 = scalar_select %p42, 0, %s41
    %s44 = ssub.s32 %s17, %s43
    %s45 = ssub.s32 %s18, %s39
    %s46 = sor.u32 %s44, %s45
    %s47 = ssub.s32 %s19, %s35
    %s48 = sor.u32 %s46, %s47
    %p49 = scmp.eq.s32.totalorder %s48, 0
    %s51 = sadd.s32 %s50, 1
    %s52 = scalar_select %p49, %s50, %s51
    %p55 = pneg %p49
    %p56 = scmp.eq.s32.totalorder %s10, 7
    %p57 = por %p55, %p56
    %p58 = scmp.ne.s32.totalorder %s50, %s53
    %p59 = scmp.eq.s32.totalorder %s10, 0
    %p60 = por %p58, %p59
    %p61 = scmp.ne.s32.totalorder %s50, %s53
    %p62 = scmp.eq.s32.totalorder %s15, 7
    %p63 = por %p61, %p62
    %p64 = scmp.ne.s32.totalorder %s53, %s54
    %p65 = scmp.eq.s32.totalorder %s15, 0
    %p66 = por %p64, %p65
    %p67 = scmp.ne.s32.totalorder %s53, %s54
    %p68 = scmp.eq.s32.totalorder %s16, 7
    %p69 = por %p67, %p68
    %p71 = scmp.ne.s32.totalorder %s54, %s70
    %p72 = scmp.eq.s32.totalorder %s16, 0
    %p73 = por %p71, %p72
    %s74 = ssub.s32 %s17, %s43
    %s75 = ssub.s32 %s18, %s39
    %s76 = sor.u32 %s74, %s75
    %s77 = ssub.s32 %s20, %s31
    %s78 = sor.u32 %s76, %s77
    %p79 = scmp.eq.s32.totalorder %s78, 0
    %s81 = sadd.s32 %s80, 1
    %s82 = scalar_select %p79, %s80, %s81
    %p85 = pneg %p79
    %p86 = scmp.eq.s32.totalorder %s10, 7
    %p87 = por %p85, %p86
    %p88 = scmp.ne.s32.totalorder %s80, %s83
    %p89 = scmp.eq.s32.totalorder %s10, 0
    %p90 = por %p88, %p89
    %p91 = scmp.ne.s32.totalorder %s80, %s83
    %p92 = scmp.eq.s32.totalorder %s15, 7
    %p93 = por %p91, %p92
    %p94 = scmp.ne.s32.totalorder %s83, %s84
    %p95 = scmp.eq.s32.totalorder %s15, 0
    %p96 = por %p94, %p95
    %p97 = scmp.ne.s32.totalorder %s83, %s84
    %p98 = scmp.eq.s32.totalorder %s16, 7
    %p99 = por %p97, %p98
    %p101 = scmp.ne.s32.totalorder %s84, %s100
    %p102 = scmp.eq.s32.totalorder %s16, 0
    %p103 = por %p101, %p102
    %s104 = ssub.s32 %s17, %s43
    %s105 = ssub.s32 %s18, %s39
    %s106 = sor.u32 %s104, %s105
    %s107 = ssub.s32 %s20, %s31
    %s108 = sor.u32 %s106, %s107
    %p109 = scmp.eq.s32.totalorder %s108, 0
    %s111 = sadd.s32 %s110, 1
    %s112 = scalar_select %p109, %s110, %s111
    %p115 = pneg %p109
    %p116 = scmp.eq.s32.totalorder %s10, 7
    %p117 = por %p115, %p116
    %p118 = scmp.ne.s32.totalorder %s110, %s113
    %p119 = scmp.eq.s32.totalorder %s10, 0
    %p120 = por %p118, %p119
    %p121 = scmp.ne.s32.totalorder %s110, %s113
    %p122 = scmp.eq.s32.totalorder %s15, 7
    %p123 = por %p121, %p122
    %p124 = scmp.ne.s32.totalorder %s113, %s114
    %p125 = scmp.eq.s32.totalorder %s15, 0
    %p126 = por %p124, %p125
    %p127 = scmp.ne.s32.totalorder %s113, %s114
    %p128 = scmp.eq.s32.totalorder %s16, 7
    %p129 = por %p127, %p128
    %p131 = scmp.ne.s32.totalorder %s114, %s130
    %p132 = scmp.eq.s32.totalorder %s16, 0
    %p133 = por %p131, %p132
    %s134 = ssub.s32 %s17, %s43
    %s135 = ssub.s32 %s18, %s39
    %s136 = sor.u32 %s134, %s135
    %s137 = ssub.s32 %s19, %s35
    %s138 = sor.u32 %s136, %s137
    %s139 = ssub.s32 %s20, %s31
    %s140 = sor.u32 %s138, %s139
    %p141 = scmp.eq.s32.totalorder %s140, 0
    %s143 = sadd.s32 %s142, 1
    %s144 = scalar_select %p141, %s142, %s143
    %p147 = pneg %p141
    %p148 = scmp.eq.s32.totalorder %s10, 7
    %p149 = por %p147, %p148
    %p150 = scmp.ne.s32.totalorder %s142, %s145
    %p151 = scmp.eq.s32.totalorder %s10, 0
    %p152 = por %p150, %p151
    %p153 = scmp.ne.s32.totalorder %s142, %s145
    %p154 = scmp.eq.s32.totalorder %s15, 7
    %p155 = por %p153, %p154
    %p156 = scmp.ne.s32.totalorder %s145, %s146
    %p157 = scmp.eq.s32.totalorder %s15, 0
    %p158 = por %p156, %p157
    %p159 = scmp.ne.s32.totalorder %s145, %s146
    %p160 = scmp.eq.s32.totalorder %s16, 7
    %p161 = por %p159, %p160
    %p163 = scmp.ne.s32.totalorder %s146, %s162
    %p164 = scmp.eq.s32.totalorder %s16, 0
    %p165 = por %p163, %p164
    %s166 = ssub.s32 %s17, %s43
    %s167 = ssub.s32 %s18, %s39
    %s168 = sor.u32 %s166, %s167
    %s169 = ssub.s32 %s19, %s35
    %s170 = sor.u32 %s168, %s169
    %p171 = scmp.eq.s32.totalorder %s170, 0
    %s173 = sadd.s32 %s172, 1
    %s174 = scalar_select %p171, %s172, %s173
    %p177 = pneg %p171
    %p178 = scmp.eq.s32.totalorder %s10, 7
    %p179 = por %p177, %p178
    %p180 = scmp.ne.s32.totalorder %s172, %s175
    %p181 = scmp.eq.s32.totalorder %s10, 0
    %p182 = por %p180, %p181
    %p183 = scmp.ne.s32.totalorder %s172, %s175
    %p184 = scmp.eq.s32.totalorder %s15, 7
    %p185 = por %p183, %p184
    %p186 = scmp.ne.s32.totalorder %s175, %s176
    %p187 = scmp.eq.s32.totalorder %s15, 0
    %p188 = por %p186, %p187
    %p189 = scmp.ne.s32.totalorder %s175, %s176
    %p190 = scmp.eq.s32.totalorder %s16, 7
    %p191 = por %p189, %p190
    %p193 = scmp.ne.s32.totalorder %s176, %s192
    %p194 = scmp.eq.s32.totalorder %s16, 0
    %p195 = por %p193, %p194
    %p196 = scmp.le.s32.totalorder 1, %s10
    %p197 = scmp.lt.s32.totalorder %s10, 9
    %p198 = pnand %p196, %p197
    %p199 = pneg %p198
    // Predicated region
    $region9: #{attention_forward.6} parent=5 // pred_check
      _
    $region10: #{attention_forward.6} parent=5 // pred_check_branch
      %201 = sbr.rel (%p198) target = $region12
    $region11: #{attention_forward.6} parent=5 // pred_region
      %s202 = ssub.s32 %s10, 1
    $region12: #{attention_forward.6} parent=5 // pred_fallthru
      _
    %p203 = scmp.lt.s32.totalorder %s10, 8
    // Predicated region
    $region13: #{attention_forward.6} parent=5 // pred_check
      %p204 = pneg %p203
    $region14: #{attention_forward.6} parent=5 // pred_check_branch
      %206 = sbr.rel (%p204) target = $region16
    $region15: #{attention_forward.6} parent=5 // pred_region
      // Predicated region
      $region17: #{attention_forward.6} parent=15 // pred_check
        %p207 = pneg %p60
      $region18: #{attention_forward.6} parent=15 // pred_check_branch
        %209 = sbr.rel (%p207) target = $region20
      $region19: #{attention_forward.6} parent=15 // pred_region
        %p210 = scmp.lt.s32.totalorder %s17, 1
        %s211 = scalar_select %p210, %s17, 1
        %p212 = scmp.lt.s32.totalorder %s18, 3
        %s213 = scalar_select %p212, %s18, 3
        %p214 = scmp.lt.s32.totalorder %s19, 0
        %s215 = scalar_select %p214, %s19, 0
        %s216 = sadd.s32 %s215, %s213
        %s217 = smul.addr %s211, 4
        %s218 = sadd.s32 %s216, %s217
        %s219 = smul.addr %s218, 8
        %s220 = scalar_lea.vmem %s0, %s219
      $region20: #{attention_forward.6} parent=15 // pred_fallthru
        _
      // Predicated region
      $region21: #{attention_forward.6} parent=15 // pred_check
        %p221 = pneg %p90
      $region22: #{attention_forward.6} parent=15 // pred_check_branch
        %223 = sbr.rel (%p221) target = $region24
      $region23: #{attention_forward.6} parent=15 // pred_region
        %p224 = scmp.lt.s32.totalorder %s17, 1
        %s225 = scalar_select %p224, %s17, 1
        %p226 = scmp.lt.s32.totalorder %s18, 3
        %s227 = scalar_select %p226, %s18, 3
        %p228 = scmp.lt.s32.totalorder %s20, 0
        %s229 = scalar_select %p228, %s20, 0
        %s230 = sadd.s32 %s229, %s227
        %s231 = smul.addr %s225, 4
        %s232 = sadd.s32 %s230, %s231
        %s233 = sadd.s32 %s232, 8
        %s234 = smul.addr %s233, 8
        %s235 = scalar_lea.vmem %s1, %s234
      $region24: #{attention_forward.6} parent=15 // pred_fallthru
        _
      // Predicated region
      $region25: #{attention_forward.6} parent=15 // pred_check
        %p236 = pneg %p120
      $region26: #{attention_forward.6} parent=15 // pred_check_branch
        %238 = sbr.rel (%p236) target = $region28
      $region27: #{attention_forward.6} parent=15 // pred_region
        %p239 = scmp.lt.s32.totalorder %s17, 1
        %s240 = scalar_select %p239, %s17, 1
        %p241 = scmp.lt.s32.totalorder %s18, 3
        %s242 = scalar_select %p241, %s18, 3
        %p243 = scmp.lt.s32.totalorder %s20, 0
        %s244 = scalar_select %p243, %s20, 0
        %s245 = sadd.s32 %s244, %s242
        %s246 = smul.addr %s240, 4
        %s247 = sadd.s32 %s245, %s246
        %s248 = sadd.s32 %s247, 16
        %s249 = smul.addr %s248, 8
        %s250 = scalar_lea.vmem %s2, %s249
      $region28: #{attention_forward.6} parent=15 // pred_fallthru
        _
      // Predicated region
      $region29: #{attention_forward.6} parent=15 // pred_check
        %p251 = pneg %p152
      $region30: #{attention_forward.6} parent=15 // pred_check_branch
        %253 = sbr.rel (%p251) target = $region32
      $region31: #{attention_forward.6} parent=15 // pred_region
        %p254 = scmp.lt.s32.totalorder %s17, 1
        %s255 = scalar_select %p254, %s17, 1
        %p256 = scmp.lt.s32.totalorder %s18, 3
        %s257 = scalar_select %p256, %s18, 3
        %p258 = scmp.lt.s32.totalorder %s19, 0
        %s259 = scalar_select %p258, %s19, 0
        %p260 = scmp.lt.s32.totalorder %s20, 0
        %s261 = scalar_select %p260, %s20, 0
        %s262 = sadd.s32 %s261, %s259
        %s263 = sadd.s32 %s262, %s257
        %s264 = smul.addr %s255, 4
        %s265 = sadd.s32 %s263, %s264
        %s266 = smul.addr %s265, 8
        %s267 = scalar_lea.vmem %s3, %s266
      $region32: #{attention_forward.6} parent=15 // pred_fallthru
        _
    $region16: #{attention_forward.6} parent=5 // pred_fallthru
      _
    %p268 = scmp.le.s32.totalorder 1, %s10
    %p269 = scmp.lt.s32.totalorder %s10, 9
    %p270 = pnand %p268, %p269
    %p271 = pneg %p270
    // Predicated region
    $region33: #{attention_forward.6} parent=5 // pred_check
      _
    $region34: #{attention_forward.6} parent=5 // pred_check_branch
      %273 = sbr.rel (%p270) target = $region36
    $region35: #{attention_forward.6} parent=5 // pred_region
      %s274 = ssub.s32 %s10, 1
      %p275 = scmp.lt.s32.totalorder %s21, 1
      %s276 = scalar_select %p275, %s21, 1
      %p277 = scmp.lt.s32.totalorder %s22, 3
      %s278 = scalar_select %p277, %s22, 3
      %p279 = scmp.lt.s32.totalorder %s23, 0
      %s280 = scalar_select %p279, %s23, 0
      %s281 = sadd.s32 %s280, %s278
      %s282 = smul.addr %s276, 4
      %s283 = sadd.s32 %s281, %s282
      %s284 = smul.addr %s283, 8
      %s285 = scalar_lea.vmem %s0, %s284
      %p286 = pneg %p66
      %p287 = pneg %p63
      %p288 = scmp.lt.s32.totalorder %s21, 1
      %s289 = scalar_select %p288, %s21, 1
      %p290 = scmp.lt.s32.totalorder %s22, 3
      %s291 = scalar_select %p290, %s22, 3
      %p292 = scmp.lt.s32.totalorder %s24, 0
      %s293 = scalar_select %p292, %s24, 0
      %s294 = sadd.s32 %s293, %s291
      %s295 = smul.addr %s289, 4
      %s296 = sadd.s32 %s294, %s295
      %s297 = sadd.s32 %s296, 8
      %s298 = smul.addr %s297, 8
      %s299 = scalar_lea.vmem %s1, %s298
      %p300 = pneg %p96
      %p301 = pneg %p93
      %p302 = scmp.lt.s32.totalorder %s21, 1
      %s303 = scalar_select %p302, %s21, 1
      %p304 = scmp.lt.s32.totalorder %s22, 3
      %s305 = scalar_select %p304, %s22, 3
      %p306 = scmp.lt.s32.totalorder %s24, 0
      %s307 = scalar_select %p306, %s24, 0
      %s308 = sadd.s32 %s307, %s305
      %s309 = smul.addr %s303, 4
      %s310 = sadd.s32 %s308, %s309
      %s311 = sadd.s32 %s310, 16
      %s312 = smul.addr %s311, 8
      %s313 = scalar_lea.vmem %s2, %s312
      %p314 = pneg %p126
      %p315 = pneg %p123
      %p316 = scmp.lt.s32.totalorder %s21, 1
      %s317 = scalar_select %p316, %s21, 1
      %p318 = scmp.lt.s32.totalorder %s22, 3
      %s319 = scalar_select %p318, %s22, 3
      %p320 = scmp.lt.s32.totalorder %s23, 0
      %s321 = scalar_select %p320, %s23, 0
      %p322 = scmp.lt.s32.totalorder %s24, 0
      %s323 = scalar_select %p322, %s24, 0
      %s324 = sadd.s32 %s323, %s321
      %s325 = sadd.s32 %s324, %s319
      %s326 = smul.addr %s317, 4
      %s327 = sadd.s32 %s325, %s326
      %s328 = smul.addr %s327, 8
      %s329 = scalar_lea.vmem %s3, %s328
      %p330 = pneg %p158
      %p331 = pneg %p155
      %p332 = pneg %p188
      %p333 = pneg %p185
      %p334 = scmp.lt.s32.totalorder %s21, 1
      %s335 = scalar_select %p334, %s21, 1
      %p336 = scmp.lt.s32.totalorder %s22, 3
      %s337 = scalar_select %p336, %s22, 3
      %p338 = scmp.lt.s32.totalorder %s23, 0
      %s339 = scalar_select %p338, %s23, 0
      %s340 = sadd.s32 %s339, %s337
      %s341 = smul.addr %s335, 4
      %s342 = sadd.s32 %s340, %s341
      %s343 = smul.addr %s342, 8
      %s344 = scalar_lea.vmem %s4, %s343
      %p345 = scmp.lt.s32.totalorder %s21, 1
      %s346 = scalar_select %p345, %s21, 1
      %p347 = scmp.lt.s32.totalorder %s22, 3
      %s348 = scalar_select %p347, %s22, 3
      %p349 = scmp.lt.s32.totalorder %s23, 0
      %s350 = scalar_select %p349, %s23, 0
      %s351 = sadd.s32 %s350, %s348
      %s352 = smul.addr %s346, 4
      %s353 = sadd.s32 %s351, %s352
      %s354 = smul.addr %s353, 8
      %s355 = scalar_lea.vmem %s0, %s354
      %p356 = scmp.lt.s32.totalorder %s21, 1
      %s357 = scalar_select %p356, %s21, 1
      %p358 = scmp.lt.s32.totalorder %s22, 3
      %s359 = scalar_select %p358, %s22, 3
      %p360 = scmp.lt.s32.totalorder %s24, 0
      %s361 = scalar_select %p360, %s24, 0
      %s362 = sadd.s32 %s361, %s359
      %s363 = smul.addr %s357, 4
      %s364 = sadd.s32 %s362, %s363
      %s365 = sadd.s32 %s364, 8
      %s366 = smul.addr %s365, 8
      %s367 = scalar_lea.vmem %s1, %s366
      %p368 = scmp.lt.s32.totalorder %s21, 1
      %s369 = scalar_select %p368, %s21, 1
      %p370 = scmp.lt.s32.totalorder %s22, 3
      %s371 = scalar_select %p370, %s22, 3
      %p372 = scmp.lt.s32.totalorder %s24, 0
      %s373 = scalar_select %p372, %s24, 0
      %s374 = sadd.s32 %s373, %s371
      %s375 = smul.addr %s369, 4
      %s376 = sadd.s32 %s374, %s375
      %s377 = sadd.s32 %s376, 16
      %s378 = smul.addr %s377, 8
      %s379 = scalar_lea.vmem %s2, %s378
      %p380 = scmp.lt.s32.totalorder %s21, 1
      %s381 = scalar_select %p380, %s21, 1
      %p382 = scmp.lt.s32.totalorder %s22, 3
      %s383 = scalar_select %p382, %s22, 3
      %p384 = scmp.lt.s32.totalorder %s23, 0
      %s385 = scalar_select %p384, %s23, 0
      %p386 = scmp.lt.s32.totalorder %s24, 0
      %s387 = scalar_select %p386, %s24, 0
      %s388 = sadd.s32 %s387, %s385
      %s389 = sadd.s32 %s388, %s383
      %s390 = smul.addr %s381, 4
      %s391 = sadd.s32 %s389, %s390
      %s392 = smul.addr %s391, 8
      %s393 = scalar_lea.vmem %s3, %s392
      %p394 = scmp.lt.s32.totalorder %s21, 1
      %s395 = scalar_select %p394, %s21, 1
      %p396 = scmp.lt.s32.totalorder %s22, 3
      %s397 = scalar_select %p396, %s22, 3
      %p398 = scmp.lt.s32.totalorder %s23, 0
      %s399 = scalar_select %p398, %s23, 0
      %s400 = sadd.s32 %s399, %s397
      %s401 = smul.addr %s395, 4
      %s402 = sadd.s32 %s400, %s401
      %s403 = smul.addr %s402, 8
      %s404 = scalar_lea.vmem %s4, %s403
      %p405 = scmp.eq.s32.totalorder %s24, 0
      // Predicated region
      $region37: #{attention_forward.6} parent=35 // pred_check
        %p406 = pneg %p405
      $region38: #{attention_forward.6} parent=35 // pred_check_branch
        %408 = sbr.rel (%p406) target = $region40
      $region39: #{attention_forward.6} parent=35 // pred_region
        %vm409 = vcmask 7168
        %410 = vst.msk [vmem:[#allocation2] sm:$0xff] %vm409, -inf
        %411 = vst.msk [vmem:[#allocation3] sm:$0xff] %vm409, 0.0
        %vm412 = vcmask 130048
        %413 = vst.msk [vmem:[#allocation4] sm:$0xff] %vm412, 0.0
      $region40: #{attention_forward.6} parent=35 // pred_fallthru
        _
      %v414 = vld [vmem:[%s355] sm:$0xff]
      %v415 = vld [vmem:[%s367] sm:$0xff]
      %v416 = vld [vmem:[%s379] sm:$0xff]
      %v417 = vld [vmem:[%s393] sm:$0xff]
      %vm418 = vcmask 130048
      %v420 = vsel %vm418, %v414, 0
      %v423 = vsel %vm418, %v415, 0
      %425 = vmatprep.subr.mxu0 0.0
      %426 = vmatpush1.xpose.msra.mxu0 0.0
      %427 = vmatprep.subr.mxu0 0.0
      %428 = vmatpush1.xpose.msra.mxu0 0.0
      %429 = vmatprep.subr.mxu0 0.0
      %430 = vmatpush1.xpose.msra.mxu0 0.0
      %431 = vmatprep.subr.mxu0 0.0
      %432 = vmatpush1.xpose.msra.mxu0 0.0
      %433 = vmatprep.subr.mxu0 0.0
      %434 = vmatpush1.xpose.msra.mxu0 0.0
      %435 = vmatprep.subr.mxu0 0.0
      %436 = vmatpush1.xpose.msra.mxu0 0.0
      %437 = vmatprep.subr.mxu0 0.0
      %438 = vmatpush1.xpose.msra.mxu0 0.0
      %439 = vmatprep.subr.mxu0 0.0
      %440 = vmatpush1.xpose.msra.mxu0 0.0
      %441 = vmatprep.subr.mxu0 0.0
      %442 = vmatpush1.xpose.msra.mxu0 0.0
      %443 = vmatprep.subr.mxu0 0.0
      %444 = vmatpush1.xpose.msra.mxu0 0.0
      %445 = vmatprep.subr.mxu0 0.0
      %446 = vmatpush1.xpose.msra.mxu0 0.0
      %447 = vmatprep.subr.mxu0 0.0
      %448 = vmatpush1.xpose.msra.mxu0 0.0
      %449 = vmatprep.subr.mxu0 0.0
      %450 = vmatpush1.xpose.msra.mxu0 0.0
      %451 = vmatprep.subr.mxu0 0.0
      %452 = vmatpush1.xpose.msra.mxu0 0.0
      %453 = vmatprep.subr.mxu0 0.0
      %454 = vmatpush1.xpose.msra.mxu0 0.0
      %455 = vmatprep.subr.mxu0 0.0
      %456 = vmatpush1.xpose.msra.mxu0 %v423
      %457 = vmatprep.subr.mxu0 0.0
      %458 = vmatpush2.xpose.msra.mxu0 0.0
      %459 = vmatprep.subr.mxu0 0.0
      %460 = vmatpush2.xpose.msra.mxu0 0.0
      %461 = vmatprep.subr.mxu0 0.0
      %462 = vmatpush2.xpose.msra.mxu0 0.0
      %463 = vmatprep.subr.mxu0 0.0
      %464 = vmatpush2.xpose.msra.mxu0 0.0
      %465 = vmatprep.subr.mxu0 0.0
      %466 = vmatpush2.xpose.msra.mxu0 0.0
      %467 = vmatprep.subr.mxu0 0.0
      %468 = vmatpush2.xpose.msra.mxu0 0.0
      %469 = vmatprep.subr.mxu0 0.0
      %470 = vmatpush2.xpose.msra.mxu0 0.0
      %471 = vmatprep.subr.mxu0 0.0
      %472 = vmatpush2.xpose.msra.mxu0 0.0
      %473 = vmatprep.subr.mxu0 0.0
      %474 = vmatpush2.xpose.msra.mxu0 0.0
      %475 = vmatprep.subr.mxu0 0.0
      %476 = vmatpush2.xpose.msra.mxu0 0.0
      %477 = vmatprep.subr.mxu0 0.0
      %478 = vmatpush2.xpose.msra.mxu0 0.0
      %479 = vmatprep.subr.mxu0 0.0
      %480 = vmatpush2.xpose.msra.mxu0 0.0
      %481 = vmatprep.subr.mxu0 0.0
      %482 = vmatpush2.xpose.msra.mxu0 0.0
      %483 = vmatprep.subr.mxu0 0.0
      %484 = vmatpush2.xpose.msra.mxu0 0.0
      %485 = vmatprep.subr.mxu0 0.0
      %486 = vmatpush2.xpose.msra.mxu0 0.0
      %487 = vmatprep.subr.mxu0 0.0
      %488 = vmatpush2.xpose.msra.mxu0 0.0
      %489 = vmatprep.mubr.f32.mxu0 0.0
      %490 = vmatmul.mubr.f32.gmra.mxu0 %v420
      %v491 = vpop.f32.mrf.mxu0
      %v492 = vadd.f32 %v417, %v491
      %v493 = vpop.f32.mrf.mxu0
      %494 = vdwg.mxu0
      %v495 = vld [vmem:[#allocation2] sm:$0xff]
      %vm496 = vcmask 64512
      %v497 = vsel %vm496, %v492, -inf
      %498 = vmax.xlane.f32.xlu0 %v497
      %v499 = vpop.xlane.xlu0 %498
      %v500 = vmax.f32 %v495, %v499
      %v501 = vsub.f32 %v495, %v500
      %v502 = vmul.f32 %v501, 1.442695
      %v503 = vpow.pop %v502
      %505 = vset.pattern.permute.xlu0 0
      %506 = vperm.xlu0 %505, %v500
      %v507 = vpop.permute.xlu0 %506
      %v509 = vsub.f32 %v492, %v507
      %v510 = vmul.f32 %v509, 1.442695
      %v511 = vpow.pop %v510
      %v512 = vld [vmem:[#allocation3] sm:$0xff]
      %v513 = vmul.f32 %v503, %v512
      %v514 = vsel %vm496, %v511, 0.0
      %515 = vadd.xlane.f32.xlu0 %v514
      %v516 = vpop.xlane.xlu0 %515
      %v517 = vadd.f32 %v513, %v516
      %vm518 = vcmask 7168
      %519 = vst.msk [vmem:[#allocation3] sm:$0xff] %vm518, %v517
      %v520 = vld [vmem:[#allocation4] sm:$0xff]
      %522 = vset.pattern.permute.xlu0 0
      %523 = vperm.xlu0 %522, %v503
      %v524 = vpop.permute.xlu0 %523
      %v526 = vmul.f32 %v524, %v520
      %v528 = vsel %vm496, %v511, 0
      %530 = vmatprep.subr.mxu0 0.0
      %531 = vmatpush1.msra.mxu0 0.0
      %532 = vmatprep.subr.mxu0 0.0
      %533 = vmatpush1.msra.mxu0 0.0
      %534 = vmatprep.subr.mxu0 0.0
      %535 = vmatpush1.msra.mxu0 0.0
      %536 = vmatprep.subr.mxu0 0.0
      %537 = vmatpush1.msra.mxu0 0.0
      %538 = vmatprep.subr.mxu0 0.0
      %539 = vmatpush1.msra.mxu0 0.0
      %540 = vmatprep.subr.mxu0 0.0
      %541 = vmatpush1.msra.mxu0 0.0
      %542 = vmatprep.subr.mxu0 0.0
      %543 = vmatpush1.msra.mxu0 0.0
      %544 = vmatprep.subr.mxu0 0.0
      %545 = vmatpush1.msra.mxu0 0.0
      %546 = vmatprep.subr.mxu0 0.0
      %547 = vmatpush1.msra.mxu0 0.0
      %548 = vmatprep.subr.mxu0 0.0
      %549 = vmatpush1.msra.mxu0 0.0
      %550 = vmatprep.subr.mxu0 0.0
      %551 = vmatpush1.msra.mxu0 0.0
      %552 = vmatprep.subr.mxu0 0.0
      %553 = vmatpush1.msra.mxu0 0.0
      %554 = vmatprep.subr.mxu0 0.0
      %555 = vmatpush1.msra.mxu0 0.0
      %556 = vmatprep.subr.mxu0 0.0
      %557 = vmatpush1.msra.mxu0 0.0
      %558 = vmatprep.subr.mxu0 0.0
      %559 = vmatpush1.msra.mxu0 0.0
      %560 = vmatprep.subr.mxu0 0.0
      %561 = vmatpush1.msra.mxu0 %v416
      %562 = vmatprep.subr.mxu0 0.0
      %563 = vmatpush2.msra.mxu0 0.0
      %564 = vmatprep.subr.mxu0 0.0
      %565 = vmatpush2.msra.mxu0 0.0
      %566 = vmatprep.subr.mxu0 0.0
      %567 = vmatpush2.msra.mxu0 0.0
      %568 = vmatprep.subr.mxu0 0.0
      %569 = vmatpush2.msra.mxu0 0.0
      %570 = vmatprep.subr.mxu0 0.0
      %571 = vmatpush2.msra.mxu0 0.0
      %572 = vmatprep.subr.mxu0 0.0
      %573 = vmatpush2.msra.mxu0 0.0
      %574 = vmatprep.subr.mxu0 0.0
      %575 = vmatpush2.msra.mxu0 0.0
      %576 = vmatprep.subr.mxu0 0.0
      %577 = vmatpush2.msra.mxu0 0.0
      %578 = vmatprep.subr.mxu0 0.0
      %579 = vmatpush2.msra.mxu0 0.0
      %580 = vmatprep.subr.mxu0 0.0
      %581 = vmatpush2.msra.mxu0 0.0
      %582 = vmatprep.subr.mxu0 0.0
      %583 = vmatpush2.msra.mxu0 0.0
      %584 = vmatprep.subr.mxu0 0.0
      %585 = vmatpush2.msra.mxu0 0.0
      %586 = vmatprep.subr.mxu0 0.0
      %587 = vmatpush2.msra.mxu0 0.0
      %588 = vmatprep.subr.mxu0 0.0
      %589 = vmatpush2.msra.mxu0 0.0
      %590 = vmatprep.subr.mxu0 0.0
      %591 = vmatpush2.msra.mxu0 0.0
      %592 = vmatprep.subr.mxu0 0.0
      %593 = vmatpush2.msra.mxu0 0.0
      %594 = vmatprep.mubr.f32.mxu0 0.0
      %595 = vmatmul.mubr.f32.gmra.mxu0 %v528
      %v596 = vpop.f32.mrf.mxu0
      %v597 = vadd.f32 0.0, %v596
      %v598 = vpop.f32.mrf.mxu0
      %599 = vdwg.mxu0
      %v600 = vadd.f32 %v526, %v597
      %601 = vst.msk [vmem:[#allocation4] sm:$0xff] %vm418, %v600
      %602 = vst.msk [vmem:[#allocation2] sm:$0xff] %vm518, %v500
      // Predicated region
      $region41: #{attention_forward.6} parent=35 // pred_check
        %p603 = pneg %p405
      $region42: #{attention_forward.6} parent=35 // pred_check_branch
        %605 = sbr.rel (%p603) target = $region44
      $region43: #{attention_forward.6} parent=35 // pred_region
        %v606 = vld [vmem:[#allocation3] sm:$0xff]
        %v607 = vrcp.pop %v606
        %v608 = vld [vmem:[#allocation4] sm:$0xff]
        %610 = vset.pattern.permute.xlu0 0
        %611 = vperm.xlu0 %610, %v607
        %v612 = vpop.permute.xlu0 %611
        %v614 = vmul.f32 %v608, %v612
        %615 = vst.msk [vmem:[%s404] sm:$0xff] %vm418, %v614
      $region44: #{attention_forward.6} parent=35 // pred_fallthru
        _
      %p616 = scmp.lt.s32.totalorder %s21, 1
      %s617 = scalar_select %p616, %s21, 1
      %p618 = scmp.lt.s32.totalorder %s22, 3
      %s619 = scalar_select %p618, %s22, 3
      %p620 = scmp.lt.s32.totalorder %s23, 0
      %s621 = scalar_select %p620, %s23, 0
      %s622 = sadd.s32 %s621, %s619
      %s623 = smul.addr %s617, 4
      %s624 = sadd.s32 %s622, %s623
      %s625 = smul.addr %s624, 8
      %s626 = scalar_lea.vmem %s4, %s625
      // Predicated region
      $region45: #{attention_forward.6} parent=35 // pred_check
        %p627 = pneg %p185
      $region46: #{attention_forward.6} parent=35 // pred_check_branch
        %629 = sbr.rel (%p627) target = $region48
      $region47: #{attention_forward.6} parent=35 // pred_region
        _
      $region48: #{attention_forward.6} parent=35 // pred_fallthru
        _
    $region36: #{attention_forward.6} parent=5 // pred_fallthru
      _
    %p630 = scmp.le.s32.totalorder 2, %s10
    // Predicated region
    $region49: #{attention_forward.6} parent=5 // pred_check
      %p631 = pneg %p630
    $region50: #{attention_forward.6} parent=5 // pred_check_branch
      %633 = sbr.rel (%p631) target = $region52
    $region51: #{attention_forward.6} parent=5 // pred_region
      %s634 = ssub.s32 %s10, 2
      // Predicated region
      $region53: #{attention_forward.6} parent=51 // pred_check
        %p635 = pneg %p191
      $region54: #{attention_forward.6} parent=51 // pred_check_branch
        %637 = sbr.rel (%p635) target = $region56
      $region55: #{attention_forward.6} parent=51 // pred_region
        %p638 = scmp.lt.s32.totalorder %s25, 1
        %s639 = scalar_select %p638, %s25, 1
        %p640 = scmp.lt.s32.totalorder %s26, 3
        %s641 = scalar_select %p640, %s26, 3
        %p642 = scmp.lt.s32.totalorder %s27, 0
        %s643 = scalar_select %p642, %s27, 0
        %s644 = sadd.s32 %s643, %s641
        %s645 = smul.addr %s639, 4
        %s646 = sadd.s32 %s644, %s645
        %s647 = smul.addr %s646, 8
        %s648 = scalar_lea.vmem %s4, %s647
      $region56: #{attention_forward.6} parent=51 // pred_fallthru
        _
    $region52: #{attention_forward.6} parent=5 // pred_fallthru
      _
  $region6: #{attention_forward.6} parent=0 // loop_footer
    %s14 = sadd.s32 1, %s10
  $region7: #{attention_forward.6} parent=0 // loop_footer_branch
    %9 = sbr.rel target = $region3
  $region8: #{attention_forward.6} parent=0 // loop_exit
    _

// kernel: attention_forward.7
$region0: #{attention_forward.7}
  #allocation0 [shape = 'u32[]', space=smem, size = 0x4, offset = 0x4, fixed_abs, tag = 'smem constant byte address 0x4 - core index']
  #allocation1 [shape = 'u32[144,128]{1,0:T(1,128)}', space=vmem, size = 0x12000, scoped, tag = 'internal scratch']
  #allocation2 [shape = 'f32[16,32]{1,0:T(8,128)}', space=vmem, size = 0x2000, scoped, tag = 'scratch operand']
  %s0 = inlined_call_operand.vmem [shape: f32[16,64], index: 0, kind: input, shape index: {}]
  %s1 = inlined_call_operand.vmem [shape: f32[64,32], index: 1, kind: input, shape index: {}]
  %s2 = inlined_call_operand.vmem [shape: f32[1,32], index: 2, kind: input, shape index: {}]
  %s3 = inlined_call_operand.hbm [shape: f32[16,32], index: 3, kind: output, shape index: {}]
  %s4 = sld [smem:[#allocation0]]
  $region30: #{attention_forward.7} parent=0
    _
  %s6 = ssub.s32 1, %s4
  %s7 = scalar_select 0, %s6, %s4
  $region1: #{attention_forward.7} parent=0
    #allocation3 [shape = 'u8[8192]{0}', space=vmem, size = 0x2000, scoped, tag = 'output window, operand 0, single buffered']
    #allocation4 [shape = 's32[1]{0}', space=sflag, size = 0x4, scoped, tag = 'scoped memory for attention_forward.7']
    %8 = vsyncpa [#allocation4], 0
    // Predicated region
    $region2: #{attention_forward.7} parent=1 // pred_check
      _
    $region3: #{attention_forward.7} parent=1 // pred_check_branch
      %10 = sbr.rel (0) target = $region5
    $region4: #{attention_forward.7} parent=1 // pred_region
      _
    $region5: #{attention_forward.7} parent=1 // pred_fallthru
      _
    // Predicated region
    $region6: #{attention_forward.7} parent=1 // pred_check
      _
    $region7: #{attention_forward.7} parent=1 // pred_check_branch
      %12 = sbr.rel (0) target = $region9
    $region8: #{attention_forward.7} parent=1 // pred_region
      _
    $region9: #{attention_forward.7} parent=1 // pred_fallthru
      _
    // Predicated region
    $region10: #{attention_forward.7} parent=1 // pred_check
      _
    $region11: #{attention_forward.7} parent=1 // pred_check_branch
      %14 = sbr.rel (0) target = $region13
    $region12: #{attention_forward.7} parent=1 // pred_region
      _
    $region13: #{attention_forward.7} parent=1 // pred_fallthru
      _
    %p15 = scmp.eq.s32.totalorder 0, 0
    // Predicated region
    $region14: #{attention_forward.7} parent=1 // pred_check
      %p16 = pneg %p15
    $region15: #{attention_forward.7} parent=1 // pred_check_branch
      %18 = sbr.rel (%p16) target = $region17
    $region16: #{attention_forward.7} parent=1 // pred_region
      %vm19 = vcmask 261120
      %20 = vst.msk [vmem:[#allocation2] sm:$0xff] %vm19, 0.0
      %21 = vst.msk [vmem:[#allocation2 + $0x8] sm:$0xff] %vm19, 0.0
    $region17: #{attention_forward.7} parent=1 // pred_fallthru
      _
    %v22 = vld [vmem:[#allocation2] sm:$0xff]
    %v23 = vld [vmem:[#allocation2 + $0x8] sm:$0xff]
    %v24 = vld [vmem:[%s0] sm:$0xff]
    %v25 = vld [vmem:[%s0 + $0x8] sm:$0xff]
    %v26 = vld [vmem:[%s1] sm:$0xff]
    %v27 = vld [vmem:[%s1 + $0x8] sm:$0xff]
    %v28 = vld [vmem:[%s1 + $0x10] sm:$0xff]
    %v29 = vld [vmem:[%s1 + $0x18] sm:$0xff]
    %v30 = vld [vmem:[%s1 + $0x20] sm:$0xff]
    %v31 = vld [vmem:[%s1 + $0x28] sm:$0xff]
    %v32 = vld [vmem:[%s1 + $0x30] sm:$0xff]
    %v33 = vld [vmem:[%s1 + $0x38] sm:$0xff]
    %vm34 = vcmask 523264
    %v36 = vsel %vm34, %v24, 0
    %v39 = vsel %vm34, %v25, 0
    %41 = vmatprep.subr.mxu0 0.0
    %42 = vmatpush1.msra.mxu0 0.0
    %43 = vmatprep.subr.mxu0 0.0
    %44 = vmatpush1.msra.mxu0 0.0
    %45 = vmatprep.subr.mxu0 0.0
    %46 = vmatpush1.msra.mxu0 0.0
    %47 = vmatprep.subr.mxu0 0.0
    %48 = vmatpush1.msra.mxu0 0.0
    %49 = vmatprep.subr.mxu0 0.0
    %50 = vmatpush1.msra.mxu0 0.0
    %51 = vmatprep.subr.mxu0 0.0
    %52 = vmatpush1.msra.mxu0 0.0
    %53 = vmatprep.subr.mxu0 0.0
    %54 = vmatpush1.msra.mxu0 0.0
    %55 = vmatprep.subr.mxu0 0.0
    %56 = vmatpush1.msra.mxu0 0.0
    %57 = vmatprep.subr.mxu0 0.0
    %58 = vmatpush1.msra.mxu0 %v33
    %59 = vmatprep.subr.mxu0 0.0
    %60 = vmatpush1.msra.mxu0 %v32
    %61 = vmatprep.subr.mxu0 0.0
    %62 = vmatpush1.msra.mxu0 %v31
    %63 = vmatprep.subr.mxu0 0.0
    %64 = vmatpush1.msra.mxu0 %v30
    %65 = vmatprep.subr.mxu0 0.0
    %66 = vmatpush1.msra.mxu0 %v29
    %67 = vmatprep.subr.mxu0 0.0
    %68 = vmatpush1.msra.mxu0 %v28
    %69 = vmatprep.subr.mxu0 0.0
    %70 = vmatpush1.msra.mxu0 %v27
    %71 = vmatprep.subr.mxu0 0.0
    %72 = vmatpush1.msra.mxu0 %v26
    %73 = vmatprep.subr.mxu0 0.0
    %74 = vmatpush2.msra.mxu0 0.0
    %75 = vmatprep.subr.mxu0 0.0
    %76 = vmatpush2.msra.mxu0 0.0
    %77 = vmatprep.subr.mxu0 0.0
    %78 = vmatpush2.msra.mxu0 0.0
    %79 = vmatprep.subr.mxu0 0.0
    %80 = vmatpush2.msra.mxu0 0.0
    %81 = vmatprep.subr.mxu0 0.0
    %82 = vmatpush2.msra.mxu0 0.0
    %83 = vmatprep.subr.mxu0 0.0
    %84 = vmatpush2.msra.mxu0 0.0
    %85 = vmatprep.subr.mxu0 0.0
    %86 = vmatpush2.msra.mxu0 0.0
    %87 = vmatprep.subr.mxu0 0.0
    %88 = vmatpush2.msra.mxu0 0.0
    %89 = vmatprep.subr.mxu0 0.0
    %90 = vmatpush2.msra.mxu0 0.0
    %91 = vmatprep.subr.mxu0 0.0
    %92 = vmatpush2.msra.mxu0 0.0
    %93 = vmatprep.subr.mxu0 0.0
    %94 = vmatpush2.msra.mxu0 0.0
    %95 = vmatprep.subr.mxu0 0.0
    %96 = vmatpush2.msra.mxu0 0.0
    %97 = vmatprep.subr.mxu0 0.0
    %98 = vmatpush2.msra.mxu0 0.0
    %99 = vmatprep.subr.mxu0 0.0
    %100 = vmatpush2.msra.mxu0 0.0
    %101 = vmatprep.subr.mxu0 0.0
    %102 = vmatpush2.msra.mxu0 0.0
    %103 = vmatprep.subr.mxu0 0.0
    %104 = vmatpush2.msra.mxu0 0.0
    %105 = vmatprep.mubr.f32.mxu0 0.0
    %106 = vmatmul.mubr.f32.gmra.mxu0 %v36
    %v107 = vpop.f32.mrf.mxu0
    %v108 = vadd.f32 0.0, %v107
    %v109 = vpop.f32.mrf.mxu0
    %110 = vmatprep.mubr.f32.mxu0 0.0
    %111 = vmatmul.mubr.f32.gmra.mxu0 %v39
    %v112 = vpop.f32.mrf.mxu0
    %v113 = vadd.f32 0.0, %v112
    %v114 = vpop.f32.mrf.mxu0
    %115 = vdwg.mxu0
    %v116 = vadd.f32 %v22, %v108
    %v117 = vadd.f32 %v23, %v113
    %vm118 = vcmask 261120
    %119 = vst.msk [vmem:[#allocation2] sm:$0xff] %vm118, %v116
    %120 = vst.msk [vmem:[#allocation2 + $0x8] sm:$0xff] %vm118, %v117
    // Predicated region
    $region18: #{attention_forward.7} parent=1 // pred_check
      %p121 = pneg %p15
    $region19: #{attention_forward.7} parent=1 // pred_check_branch
      %123 = sbr.rel (%p121) target = $region21
    $region20: #{attention_forward.7} parent=1 // pred_region
      %v124 = vld [vmem:[#allocation2] sm:$0xff]
      %v125 = vld [vmem:[#allocation2 + $0x8] sm:$0xff]
      %v126 = vld [vmem:[%s2] sm:$0x1]
      %v128 = vlaneseq
      %v129 = vshrl.u32 %v128, 7
      %v130 = vsub.s32 0, %v129
      %v131 = vrot.slane %v126, %v130
      %v133 = vadd.f32 %v124, %v131
      %v134 = vadd.f32 %v125, %v131
      %135 = vst.msk [vmem:[#allocation3] sm:$0xff] %vm118, %v133
      %136 = vst.msk [vmem:[#allocation3 + $0x8] sm:$0xff] %vm118, %v134
    $region21: #{attention_forward.7} parent=1 // pred_fallthru
      _
    // Predicated region
    $region22: #{attention_forward.7} parent=1 // pred_check
      _
    $region23: #{attention_forward.7} parent=1 // pred_check_branch
      %138 = sbr.rel (0) target = $region25
    $region24: #{attention_forward.7} parent=1 // pred_region
      %s140 = ssub.s32 256, 256
      %141 = vsyncadd [#allocation4], %s140
      %s142 = sshll.u32 [#allocation3], 4
      %s143 = int_to_ptr.vmem [resolvable:$true] %s142
      %148 = dma.vmem_to_hbm [thread:$0]  %s143, 256, %s3, [#allocation4], 128, 128, 8
    $region25: #{attention_forward.7} parent=1 // pred_fallthru
      _
    // Predicated region
    $region26: #{attention_forward.7} parent=1 // pred_check
      _
    $region27: #{attention_forward.7} parent=1 // pred_check_branch
      %150 = sbr.rel (0) target = $region29
    $region28: #{attention_forward.7} parent=1 // pred_region
      %151 = dma.done [#allocation4], 256
    $region29: #{attention_forward.7} parent=1 // pred_fallthru
      _
    %152 = vsyncpa [#allocation4], 1

</llo_original>
